<compile_context>
chip_gen: v5e
topology: v5e:2x2
jax: 0.10.0
libtpu: 0.0.40
codegen_flags: <defaults>
</compile_context>

<pallas_src>
import functools

import jax
import jax.numpy as jnp
from jax.experimental import pallas as pl
from jax.experimental.pallas import tpu as pltpu

LANE = 128


def _round_up(v, m):
    return (v + m - 1) // m * m


# ---------------------------------------------------------------------------
# Fused Pallas kernel: one batch element per grid step.
# ---------------------------------------------------------------------------
def _bottleneck_kernel(x_ref, w1_ref, b1_ref, w2_ref, b2_ref, w3_ref, b3_ref,
                       o_ref, h1p_ref, *, hh, ww, pad, dil):
    # x_ref:  (1, H, W, Cin_p)  bf16    (Cin_p == Cout_p, padded channels are 0)
    # w1_ref: (Cin_p, Wd_p)     bf16    (BN1 scale folded in)
    # w2_ref: (9, Wd_p, Wd_p)   bf16    (BN2 scale folded in, (kh,kw) flattened)
    # w3_ref: (Wd_p, Cout_p)    bf16    (BN3 scale folded in)
    # b*_ref: (1, C)            f32     (BN shifts)
    # o_ref:  (1, H, W, Cout_p) bf16
    # h1p_ref: (H+2p, W+2p, Wd_p) f32 VMEM scratch (spatially zero-padded h1)
    cin_p = x_ref.shape[-1]
    wd_p = w1_ref.shape[-1]
    cout_p = w3_ref.shape[-1]
    hw = hh * ww

    x2d = x_ref[...].reshape(hw, cin_p)                    # bf16 (HW, Cin_p)

    # ---- conv1 (1x1) + bn1 + relu -----------------------------------------
    y1 = jnp.dot(x2d, w1_ref[...], preferred_element_type=jnp.float32)
    h1 = jnp.maximum(y1 + b1_ref[...], 0.0)                # f32 (HW, Wd_p)

    # Stage h1 into the zero-padded spatial scratch (padding=dilation).
    h1p_ref[...] = jnp.zeros_like(h1p_ref)
    h1p_ref[pad:pad + hh, pad:pad + ww, :] = h1.reshape(hh, ww, wd_p)

    # ---- conv2 (3x3, stride=1, padding=dilation) + bn2 + relu -------------
    # 9 accumulated MXU matmuls over shifted views of the VMEM-resident h1.
    acc = None
    for k in range(9):
        kh, kw = divmod(k, 3)
        sl = h1p_ref[kh * dil:kh * dil + hh, kw * dil:kw * dil + ww, :]
        contrib = jnp.dot(sl.reshape(hw, wd_p).astype(jnp.bfloat16),
                          w2_ref[k], preferred_element_type=jnp.float32)
        acc = contrib if acc is None else acc + contrib
    h2 = jnp.maximum(acc + b2_ref[...], 0.0).astype(jnp.bfloat16)

    # ---- conv3 (1x1) + bn3 + identity residual + relu ---------------------
    y3 = jnp.dot(h2, w3_ref[...], preferred_element_type=jnp.float32)
    y3 = y3 + b3_ref[...] + x2d.astype(jnp.float32)
    o_ref[...] = jnp.maximum(y3, 0.0).reshape(1, hh, ww, cout_p).astype(o_ref.dtype)


# ---------------------------------------------------------------------------
# Wrapper
# ---------------------------------------------------------------------------
def bottleneck_forward(x_nchw, p, stride=1, dilation=1):
    if stride != 1:
        # TODO(synk): stride>1 / downsample branch not implemented.
        raise NotImplementedError("stride > 1 requires a downsample branch")

    n, cin, h, w = x_nchw.shape
    cin_p = p["w1"].shape[0]
    wd_p = p["w1"].shape[1]
    cout_p = p["w3"].shape[1]
    assert cin_p == cout_p, "identity residual requires cin == cout"

    # NCHW -> NHWC, pad channels to a 128 lane multiple, cast to bf16.
    x = jnp.transpose(x_nchw, (0, 2, 3, 1))
    x = jnp.pad(x, ((0, 0), (0, 0), (0, 0), (0, cin_p - cin))).astype(jnp.bfloat16)

    pad = dilation
    kernel = functools.partial(_bottleneck_kernel, hh=h, ww=w, pad=pad, dil=dilation)

    out = pl.pallas_call(
        kernel,
        out_shape=jax.ShapeDtypeStruct((n, h, w, cout_p), jnp.bfloat16),
        grid=(n,),
        in_specs=[
            pl.BlockSpec((1, h, w, cin_p), lambda b: (b, 0, 0, 0)),
            pl.BlockSpec((cin_p, wd_p), lambda b: (0, 0)),
            pl.BlockSpec((1, wd_p), lambda b: (0, 0)),
            pl.BlockSpec((9, wd_p, wd_p), lambda b: (0, 0, 0)),
            pl.BlockSpec((1, wd_p), lambda b: (0, 0)),
            pl.BlockSpec((wd_p, cout_p), lambda b: (0, 0)),
            pl.BlockSpec((1, cout_p), lambda b: (0, 0)),
        ],
        out_specs=pl.BlockSpec((1, h, w, cout_p), lambda b: (b, 0, 0, 0)),
        scratch_shapes=[pltpu.VMEM((h + 2 * pad, w + 2 * pad, wd_p), jnp.float32)],
        compiler_params=pltpu.CompilerParams(dimension_semantics=("parallel",)),
    )(x, p["w1"], p["b1"], p["w2"], p["b2"], p["w3"], p["b3"])

    # Drop channel padding (downsample=None => cout == cin), back to NCHW f32.
    out = out[..., :cin].astype(jnp.float32)
    return jnp.transpose(out, (0, 3, 1, 2))


# ---------------------------------------------------------------------------
# Parameter prep: fold BN scale into weights, pad channels, cast to bf16.
# ---------------------------------------------------------------------------
def fold_bn(gamma, beta, mean, var, eps=1e-5):
    scale = gamma / jnp.sqrt(var + eps)
    shift = beta - mean * scale
    return scale, shift


def prepare_params(raw, eps=1e-5):
    w1_oihw, w2_oihw, w3_oihw = raw["w1_oihw"], raw["w2_oihw"], raw["w3_oihw"]
    width, cin = w1_oihw.shape[0], w1_oihw.shape[1]
    cout = w3_oihw.shape[0]

    s1, b1 = fold_bn(*raw["bn1"], eps=eps)
    s2, b2 = fold_bn(*raw["bn2"], eps=eps)
    s3, b3 = fold_bn(*raw["bn3"], eps=eps)

    cin_p = _round_up(cin, LANE)
    wd_p = _round_up(width, LANE)
    cout_p = _round_up(cout, LANE)

    # conv1: OIHW (width, cin, 1, 1) -> (cin, width), fold s1 into columns.
    w1 = jnp.transpose(w1_oihw[:, :, 0, 0], (1, 0)) * s1[None, :]
    w1 = jnp.zeros((cin_p, wd_p), jnp.float32).at[:cin, :width].set(w1)

    # conv2: OIHW -> (kh, kw, cin, cout), fold s2, flatten (kh,kw) -> 9.
    w2 = jnp.transpose(w2_oihw, (2, 3, 1, 0)) * s2[None, None, None, :]
    w2 = jnp.zeros((3, 3, wd_p, wd_p), jnp.float32).at[:, :, :width, :width].set(w2)
    w2 = w2.reshape(9, wd_p, wd_p)

    # conv3: OIHW (cout, width, 1, 1) -> (width, cout), fold s3.
    w3 = jnp.transpose(w3_oihw[:, :, 0, 0], (1, 0)) * s3[None, :]
    w3 = jnp.zeros((wd_p, cout_p), jnp.float32).at[:width, :cout].set(w3)

    def pad_bias(b, cp):
        return jnp.zeros((1, cp), jnp.float32).at[0, :b.shape[0]].set(b)

    return {
        "w1": w1.astype(jnp.bfloat16),
        "w2": w2.astype(jnp.bfloat16),
        "w3": w3.astype(jnp.bfloat16),
        "b1": pad_bias(b1, wd_p),
        "b2": pad_bias(b2, wd_p),
        "b3": pad_bias(b3, cout_p),
    }


# ---------------------------------------------------------------------------
# Pure-JAX f32 reference (for the correctness check)
# ---------------------------------------------------------------------------
def bottleneck_ref(x_nchw, raw, stride=1, dilation=1, eps=1e-5):
    x = jnp.transpose(x_nchw, (0, 2, 3, 1))  # NHWC
    dn = ("NHWC", "HWIO", "NHWC")

    def conv(inp, w_oihw, strd, pad, dil):
        w_hwio = jnp.transpose(w_oihw, (2, 3, 1, 0))
        return jax.lax.conv_general_dilated(
            inp, w_hwio, (strd, strd), [(pad, pad), (pad, pad)],
            rhs_dilation=(dil, dil), dimension_numbers=dn)

    def bn(y, g, b, m, v):
        return (y - m) / jnp.sqrt(v + eps) * g + b

    o = jax.nn.relu(bn(conv(x, raw["w1_oihw"], 1, 0, 1), *raw["bn1"]))
    o = jax.nn.relu(bn(conv(o, raw["w2_oihw"], stride, dilation, dilation), *raw["bn2"]))
    o = bn(conv(o, raw["w3_oihw"], 1, 0, 1), *raw["bn3"])
    o = jax.nn.relu(o + x)
    return jnp.transpose(o, (0, 3, 1, 2))


# ---------------------------------------------------------------------------
# Deterministic parameter construction
# ---------------------------------------------------------------------------
def make_params(key, inplanes, planes, base_width=64, groups=1):
    width = int(planes * (base_width / 64.0)) * groups
    cout = planes * 4
    ks = jax.random.split(key, 6)

    w1 = jax.random.normal(ks[0], (width, inplanes, 1, 1), jnp.float32) * 0.1
    w2 = jax.random.normal(ks[1], (width, width, 3, 3), jnp.float32) * 0.1
    w3 = jax.random.normal(ks[2], (cout, width, 1, 1), jnp.float32) * 0.1

    def bn_params(k, c):
        k1, k2, k3, k4 = jax.random.split(k, 4)
        gamma = 1.0 + 0.1 * jax.random.normal(k1, (c,), jnp.float32)
        beta = 0.1 * jax.random.normal(k2, (c,), jnp.float32)
        mean = 0.1 * jax.random.normal(k3, (c,), jnp.float32)
        var = 1.0 + 0.1 * jax.random.uniform(k4, (c,), jnp.float32)
        return gamma, beta, mean, var

    return {
        "w1_oihw": w1, "w2_oihw": w2, "w3_oihw": w3,
        "bn1": bn_params(ks[3], width),
        "bn2": bn_params(ks[4], width),
        "bn3": bn_params(ks[5], cout),
    }


# ---------------------------------------------------------------------------
if __name__ == "__main__":
    key = jax.random.PRNGKey(0)
    k_x, k_p = jax.random.split(key)

    # Bottleneck(inplanes=16, planes=4) -> output channels 16, stride=1,
    # downsample=None, so the identity path adds directly.
    N, INPLANES, PLANES, H, W = 2, 16, 4, 8, 8
    x = jax.random.normal(k_x, (N, INPLANES, H, W), jnp.float32)

    raw = make_params(k_p, INPLANES, PLANES)
    params = prepare_params(raw)

    fwd = jax.jit(functools.partial(bottleneck_forward, stride=1, dilation=1))
    out = jax.block_until_ready(fwd(x, params))

    ref = bottleneck_ref(x, raw, stride=1, dilation=1)
    assert out.shape == (N, PLANES * 4, H, W), out.shape
    # bf16 matmuls (f32 accumulation) vs. the pure-f32 reference.
    max_err = float(jnp.max(jnp.abs(out - ref)))
    assert jnp.allclose(out, ref, atol=5e-2, rtol=5e-2), max_err

    print("KERNEL_OK")
</pallas_src>

<mosaic_0001>
module attributes {stable_mosaic.version = 11 : i64} {
  func.func @_bottleneck_kernel(%arg0: i32, %arg1: memref<1x8x8x128xbf16, #tpu.memory_space<vmem>>, %arg2: memref<128x128xbf16, #tpu.memory_space<vmem>>, %arg3: memref<1x128xf32, #tpu.memory_space<vmem>>, %arg4: memref<9x128x128xbf16, #tpu.memory_space<vmem>>, %arg5: memref<1x128xf32, #tpu.memory_space<vmem>>, %arg6: memref<128x128xbf16, #tpu.memory_space<vmem>>, %arg7: memref<1x128xf32, #tpu.memory_space<vmem>>, %arg8: memref<1x8x8x128xbf16, #tpu.memory_space<vmem>>, %arg9: memref<10x10x128xf32, #tpu.memory_space<vmem>>) attributes {dimension_semantics = [#tpu.dimension_semantics<parallel>], iteration_bounds = array<i64: 2>, scalar_prefetch = 0 : i64, scratch_operands = 1 : i64, tpu.core_type = #tpu.core_type<tc>, window_params = [{transform_indices = @transform_0, window_bounds = array<i64: 1, 8, 8, 128>}, {pipeline_mode = #tpu.pipeline_mode<synchronous>, transform_indices = @transform_1, window_bounds = array<i64: 128, 128>}, {pipeline_mode = #tpu.pipeline_mode<synchronous>, transform_indices = @transform_2, window_bounds = array<i64: 1, 128>}, {pipeline_mode = #tpu.pipeline_mode<synchronous>, transform_indices = @transform_3, window_bounds = array<i64: 9, 128, 128>}, {pipeline_mode = #tpu.pipeline_mode<synchronous>, transform_indices = @transform_4, window_bounds = array<i64: 1, 128>}, {pipeline_mode = #tpu.pipeline_mode<synchronous>, transform_indices = @transform_5, window_bounds = array<i64: 128, 128>}, {pipeline_mode = #tpu.pipeline_mode<synchronous>, transform_indices = @transform_6, window_bounds = array<i64: 1, 128>}, {transform_indices = @transform_7, window_bounds = array<i64: 1, 8, 8, 128>}]} {
    %c0 = arith.constant 0 : index
    %c0_0 = arith.constant 0 : index
    %c0_1 = arith.constant 0 : index
    %c0_2 = arith.constant 0 : index
    %0 = vector.load %arg1[%c0, %c0_0, %c0_1, %c0_2] : memref<1x8x8x128xbf16, #tpu.memory_space<vmem>>, vector<1x8x8x128xbf16>
    %1 = vector.shape_cast %0 : vector<1x8x8x128xbf16> to vector<64x128xbf16>
    %c0_3 = arith.constant 0 : index
    %c0_4 = arith.constant 0 : index
    %2 = vector.load %arg2[%c0_3, %c0_4] : memref<128x128xbf16, #tpu.memory_space<vmem>>, vector<128x128xbf16>
    %cst = arith.constant dense<0.000000e+00> : vector<64x128xf32>
    %3 = tpu.matmul %1, %2, %cst {dimension_numbers = #tpu.dot_dimension_numbers<[1], [0], [0], [1], [0, 0, 1, 1], [], []>} : vector<64x128xbf16>, vector<128x128xbf16>, vector<64x128xf32> -> vector<64x128xf32>
    %c0_5 = arith.constant 0 : index
    %c0_6 = arith.constant 0 : index
    %4 = vector.load %arg3[%c0_5, %c0_6] : memref<1x128xf32, #tpu.memory_space<vmem>>, vector<1x128xf32>
    %5 = vector.broadcast %4 : vector<1x128xf32> to vector<64x128xf32>
    %6 = arith.addf %3, %5 : vector<64x128xf32>
    %cst_7 = arith.constant 0.000000e+00 : f32
    %7 = vector.broadcast %cst_7 : f32 to vector<64x128xf32>
    %8 = arith.maximumf %6, %7 : vector<64x128xf32>
    %cst_8 = arith.constant 0.000000e+00 : f32
    %9 = vector.broadcast %cst_8 : f32 to vector<10x10x128xf32>
    %c0_9 = arith.constant 0 : index
    %c0_10 = arith.constant 0 : index
    %c0_11 = arith.constant 0 : index
    %10 = vector.load %arg9[%c0_9, %c0_10, %c0_11] : memref<10x10x128xf32, #tpu.memory_space<vmem>>, vector<10x10x128xf32>
    tpu.vector_store %arg9[%c0_9, %c0_10, %c0_11], %9 {strides = array<i32>} : memref<10x10x128xf32, #tpu.memory_space<vmem>>, vector<10x10x128xf32>,
    %11 = vector.shape_cast %8 : vector<64x128xf32> to vector<8x8x128xf32>
    %c1 = arith.constant 1 : index
    %c1_12 = arith.constant 1 : index
    %c0_13 = arith.constant 0 : index
    %12 = vector.load %arg9[%c1, %c1_12, %c0_13] : memref<10x10x128xf32, #tpu.memory_space<vmem>>, vector<8x8x128xf32>
    tpu.vector_store %arg9[%c1, %c1_12, %c0_13], %11 {strides = array<i32>} : memref<10x10x128xf32, #tpu.memory_space<vmem>>, vector<8x8x128xf32>,
    %c0_14 = arith.constant 0 : index
    %c0_15 = arith.constant 0 : index
    %c0_16 = arith.constant 0 : index
    %13 = vector.load %arg9[%c0_14, %c0_15, %c0_16] : memref<10x10x128xf32, #tpu.memory_space<vmem>>, vector<8x8x128xf32>
    %14 = vector.shape_cast %13 : vector<8x8x128xf32> to vector<64x128xf32>
    %15 = arith.truncf %14 : vector<64x128xf32> to vector<64x128xbf16>
    %c0_17 = arith.constant 0 : index
    %c0_18 = arith.constant 0 : index
    %c0_19 = arith.constant 0 : index
    %16 = vector.load %arg4[%c0_17, %c0_18, %c0_19] : memref<9x128x128xbf16, #tpu.memory_space<vmem>>, vector<1x128x128xbf16>
    %17 = vector.shape_cast %16 : vector<1x128x128xbf16> to vector<128x128xbf16>
    %cst_20 = arith.constant dense<0.000000e+00> : vector<64x128xf32>
    %18 = tpu.matmul %15, %17, %cst_20 {dimension_numbers = #tpu.dot_dimension_numbers<[1], [0], [0], [1], [0, 0, 1, 1], [], []>} : vector<64x128xbf16>, vector<128x128xbf16>, vector<64x128xf32> -> vector<64x128xf32>
    %c0_21 = arith.constant 0 : index
    %c1_22 = arith.constant 1 : index
    %c0_23 = arith.constant 0 : index
    %19 = vector.load %arg9[%c0_21, %c1_22, %c0_23] : memref<10x10x128xf32, #tpu.memory_space<vmem>>, vector<8x8x128xf32>
    %20 = vector.shape_cast %19 : vector<8x8x128xf32> to vector<64x128xf32>
    %21 = arith.truncf %20 : vector<64x128xf32> to vector<64x128xbf16>
    %c1_24 = arith.constant 1 : index
    %c0_25 = arith.constant 0 : index
    %c0_26 = arith.constant 0 : index
    %22 = vector.load %arg4[%c1_24, %c0_25, %c0_26] : memref<9x128x128xbf16, #tpu.memory_space<vmem>>, vector<1x128x128xbf16>
    %23 = vector.shape_cast %22 : vector<1x128x128xbf16> to vector<128x128xbf16>
    %cst_27 = arith.constant dense<0.000000e+00> : vector<64x128xf32>
    %24 = tpu.matmul %21, %23, %cst_27 {dimension_numbers = #tpu.dot_dimension_numbers<[1], [0], [0], [1], [0, 0, 1, 1], [], []>} : vector<64x128xbf16>, vector<128x128xbf16>, vector<64x128xf32> -> vector<64x128xf32>
    %25 = arith.addf %18, %24 : vector<64x128xf32>
    %c0_28 = arith.constant 0 : index
    %c2 = arith.constant 2 : index
    %c0_29 = arith.constant 0 : index
    %26 = vector.load %arg9[%c0_28, %c2, %c0_29] : memref<10x10x128xf32, #tpu.memory_space<vmem>>, vector<8x8x128xf32>
    %27 = vector.shape_cast %26 : vector<8x8x128xf32> to vector<64x128xf32>
    %28 = arith.truncf %27 : vector<64x128xf32> to vector<64x128xbf16>
    %c2_30 = arith.constant 2 : index
    %c0_31 = arith.constant 0 : index
    %c0_32 = arith.constant 0 : index
    %29 = vector.load %arg4[%c2_30, %c0_31, %c0_32] : memref<9x128x128xbf16, #tpu.memory_space<vmem>>, vector<1x128x128xbf16>
    %30 = vector.shape_cast %29 : vector<1x128x128xbf16> to vector<128x128xbf16>
    %cst_33 = arith.constant dense<0.000000e+00> : vector<64x128xf32>
    %31 = tpu.matmul %28, %30, %cst_33 {dimension_numbers = #tpu.dot_dimension_numbers<[1], [0], [0], [1], [0, 0, 1, 1], [], []>} : vector<64x128xbf16>, vector<128x128xbf16>, vector<64x128xf32> -> vector<64x128xf32>
    %32 = arith.addf %25, %31 : vector<64x128xf32>
    %c1_34 = arith.constant 1 : index
    %c0_35 = arith.constant 0 : index
    %c0_36 = arith.constant 0 : index
    %33 = vector.load %arg9[%c1_34, %c0_35, %c0_36] : memref<10x10x128xf32, #tpu.memory_space<vmem>>, vector<8x8x128xf32>
    %34 = vector.shape_cast %33 : vector<8x8x128xf32> to vector<64x128xf32>
    %35 = arith.truncf %34 : vector<64x128xf32> to vector<64x128xbf16>
    %c3 = arith.constant 3 : index
    %c0_37 = arith.constant 0 : index
    %c0_38 = arith.constant 0 : index
    %36 = vector.load %arg4[%c3, %c0_37, %c0_38] : memref<9x128x128xbf16, #tpu.memory_space<vmem>>, vector<1x128x128xbf16>
    %37 = vector.shape_cast %36 : vector<1x128x128xbf16> to vector<128x128xbf16>
    %cst_39 = arith.constant dense<0.000000e+00> : vector<64x128xf32>
    %38 = tpu.matmul %35, %37, %cst_39 {dimension_numbers = #tpu.dot_dimension_numbers<[1], [0], [0], [1], [0, 0, 1, 1], [], []>} : vector<64x128xbf16>, vector<128x128xbf16>, vector<64x128xf32> -> vector<64x128xf32>
    %39 = arith.addf %32, %38 : vector<64x128xf32>
    %c1_40 = arith.constant 1 : index
    %c1_41 = arith.constant 1 : index
    %c0_42 = arith.constant 0 : index
    %40 = vector.load %arg9[%c1_40, %c1_41, %c0_42] : memref<10x10x128xf32, #tpu.memory_space<vmem>>, vector<8x8x128xf32>
    %41 = vector.shape_cast %40 : vector<8x8x128xf32> to vector<64x128xf32>
    %42 = arith.truncf %41 : vector<64x128xf32> to vector<64x128xbf16>
    %c4 = arith.constant 4 : index
    %c0_43 = arith.constant 0 : index
    %c0_44 = arith.constant 0 : index
    %43 = vector.load %arg4[%c4, %c0_43, %c0_44] : memref<9x128x128xbf16, #tpu.memory_space<vmem>>, vector<1x128x128xbf16>
    %44 = vector.shape_cast %43 : vector<1x128x128xbf16> to vector<128x128xbf16>
    %cst_45 = arith.constant dense<0.000000e+00> : vector<64x128xf32>
    %45 = tpu.matmul %42, %44, %cst_45 {dimension_numbers = #tpu.dot_dimension_numbers<[1], [0], [0], [1], [0, 0, 1, 1], [], []>} : vector<64x128xbf16>, vector<128x128xbf16>, vector<64x128xf32> -> vector<64x128xf32>
    %46 = arith.addf %39, %45 : vector<64x128xf32>
    %c1_46 = arith.constant 1 : index
    %c2_47 = arith.constant 2 : index
    %c0_48 = arith.constant 0 : index
    %47 = vector.load %arg9[%c1_46, %c2_47, %c0_48] : memref<10x10x128xf32, #tpu.memory_space<vmem>>, vector<8x8x128xf32>
    %48 = vector.shape_cast %47 : vector<8x8x128xf32> to vector<64x128xf32>
    %49 = arith.truncf %48 : vector<64x128xf32> to vector<64x128xbf16>
    %c5 = arith.constant 5 : index
    %c0_49 = arith.constant 0 : index
    %c0_50 = arith.constant 0 : index
    %50 = vector.load %arg4[%c5, %c0_49, %c0_50] : memref<9x128x128xbf16, #tpu.memory_space<vmem>>, vector<1x128x128xbf16>
    %51 = vector.shape_cast %50 : vector<1x128x128xbf16> to vector<128x128xbf16>
    %cst_51 = arith.constant dense<0.000000e+00> : vector<64x128xf32>
    %52 = tpu.matmul %49, %51, %cst_51 {dimension_numbers = #tpu.dot_dimension_numbers<[1], [0], [0], [1], [0, 0, 1, 1], [], []>} : vector<64x128xbf16>, vector<128x128xbf16>, vector<64x128xf32> -> vector<64x128xf32>
    %53 = arith.addf %46, %52 : vector<64x128xf32>
    %c2_52 = arith.constant 2 : index
    %c0_53 = arith.constant 0 : index
    %c0_54 = arith.constant 0 : index
    %54 = vector.load %arg9[%c2_52, %c0_53, %c0_54] : memref<10x10x128xf32, #tpu.memory_space<vmem>>, vector<8x8x128xf32>
    %55 = vector.shape_cast %54 : vector<8x8x128xf32> to vector<64x128xf32>
    %56 = arith.truncf %55 : vector<64x128xf32> to vector<64x128xbf16>
    %c6 = arith.constant 6 : index
    %c0_55 = arith.constant 0 : index
    %c0_56 = arith.constant 0 : index
    %57 = vector.load %arg4[%c6, %c0_55, %c0_56] : memref<9x128x128xbf16, #tpu.memory_space<vmem>>, vector<1x128x128xbf16>
    %58 = vector.shape_cast %57 : vector<1x128x128xbf16> to vector<128x128xbf16>
    %cst_57 = arith.constant dense<0.000000e+00> : vector<64x128xf32>
    %59 = tpu.matmul %56, %58, %cst_57 {dimension_numbers = #tpu.dot_dimension_numbers<[1], [0], [0], [1], [0, 0, 1, 1], [], []>} : vector<64x128xbf16>, vector<128x128xbf16>, vector<64x128xf32> -> vector<64x128xf32>
    %60 = arith.addf %53, %59 : vector<64x128xf32>
    %c2_58 = arith.constant 2 : index
    %c1_59 = arith.constant 1 : index
    %c0_60 = arith.constant 0 : index
    %61 = vector.load %arg9[%c2_58, %c1_59, %c0_60] : memref<10x10x128xf32, #tpu.memory_space<vmem>>, vector<8x8x128xf32>
    %62 = vector.shape_cast %61 : vector<8x8x128xf32> to vector<64x128xf32>
    %63 = arith.truncf %62 : vector<64x128xf32> to vector<64x128xbf16>
    %c7 = arith.constant 7 : index
    %c0_61 = arith.constant 0 : index
    %c0_62 = arith.constant 0 : index
    %64 = vector.load %arg4[%c7, %c0_61, %c0_62] : memref<9x128x128xbf16, #tpu.memory_space<vmem>>, vector<1x128x128xbf16>
    %65 = vector.shape_cast %64 : vector<1x128x128xbf16> to vector<128x128xbf16>
    %cst_63 = arith.constant dense<0.000000e+00> : vector<64x128xf32>
    %66 = tpu.matmul %63, %65, %cst_63 {dimension_numbers = #tpu.dot_dimension_numbers<[1], [0], [0], [1], [0, 0, 1, 1], [], []>} : vector<64x128xbf16>, vector<128x128xbf16>, vector<64x128xf32> -> vector<64x128xf32>
    %67 = arith.addf %60, %66 : vector<64x128xf32>
    %c2_64 = arith.constant 2 : index
    %c2_65 = arith.constant 2 : index
    %c0_66 = arith.constant 0 : index
    %68 = vector.load %arg9[%c2_64, %c2_65, %c0_66] : memref<10x10x128xf32, #tpu.memory_space<vmem>>, vector<8x8x128xf32>
    %69 = vector.shape_cast %68 : vector<8x8x128xf32> to vector<64x128xf32>
    %70 = arith.truncf %69 : vector<64x128xf32> to vector<64x128xbf16>
    %c8 = arith.constant 8 : index
    %c0_67 = arith.constant 0 : index
    %c0_68 = arith.constant 0 : index
    %71 = vector.load %arg4[%c8, %c0_67, %c0_68] : memref<9x128x128xbf16, #tpu.memory_space<vmem>>, vector<1x128x128xbf16>
    %72 = vector.shape_cast %71 : vector<1x128x128xbf16> to vector<128x128xbf16>
    %cst_69 = arith.constant dense<0.000000e+00> : vector<64x128xf32>
    %73 = tpu.matmul %70, %72, %cst_69 {dimension_numbers = #tpu.dot_dimension_numbers<[1], [0], [0], [1], [0, 0, 1, 1], [], []>} : vector<64x128xbf16>, vector<128x128xbf16>, vector<64x128xf32> -> vector<64x128xf32>
    %74 = arith.addf %67, %73 : vector<64x128xf32>
    %c0_70 = arith.constant 0 : index
    %c0_71 = arith.constant 0 : index
    %75 = vector.load %arg5[%c0_70, %c0_71] : memref<1x128xf32, #tpu.memory_space<vmem>>, vector<1x128xf32>
    %76 = vector.broadcast %75 : vector<1x128xf32> to vector<64x128xf32>
    %77 = arith.addf %74, %76 : vector<64x128xf32>
    %cst_72 = arith.constant 0.000000e+00 : f32
    %78 = vector.broadcast %cst_72 : f32 to vector<64x128xf32>
    %79 = arith.maximumf %77, %78 : vector<64x128xf32>
    %80 = arith.truncf %79 : vector<64x128xf32> to vector<64x128xbf16>
    %c0_73 = arith.constant 0 : index
    %c0_74 = arith.constant 0 : index
    %81 = vector.load %arg6[%c0_73, %c0_74] : memref<128x128xbf16, #tpu.memory_space<vmem>>, vector<128x128xbf16>
    %cst_75 = arith.constant dense<0.000000e+00> : vector<64x128xf32>
    %82 = tpu.matmul %80, %81, %cst_75 {dimension_numbers = #tpu.dot_dimension_numbers<[1], [0], [0], [1], [0, 0, 1, 1], [], []>} : vector<64x128xbf16>, vector<128x128xbf16>, vector<64x128xf32> -> vector<64x128xf32>
    %c0_76 = arith.constant 0 : index
    %c0_77 = arith.constant 0 : index
    %83 = vector.load %arg7[%c0_76, %c0_77] : memref<1x128xf32, #tpu.memory_space<vmem>>, vector<1x128xf32>
    %84 = vector.broadcast %83 : vector<1x128xf32> to vector<64x128xf32>
    %85 = arith.addf %82, %84 : vector<64x128xf32>
    %86 = arith.extf %1 : vector<64x128xbf16> to vector<64x128xf32>
    %87 = arith.addf %85, %86 : vector<64x128xf32>
    %cst_78 = arith.constant 0.000000e+00 : f32
    %88 = vector.broadcast %cst_78 : f32 to vector<64x128xf32>
    %89 = arith.maximumf %87, %88 : vector<64x128xf32>
    %90 = vector.shape_cast %89 : vector<64x128xf32> to vector<1x8x8x128xf32>
    %91 = arith.truncf %90 : vector<1x8x8x128xf32> to vector<1x8x8x128xbf16>
    %c0_79 = arith.constant 0 : index
    %c0_80 = arith.constant 0 : index
    %c0_81 = arith.constant 0 : index
    %c0_82 = arith.constant 0 : index
    %92 = vector.load %arg8[%c0_79, %c0_80, %c0_81, %c0_82] : memref<1x8x8x128xbf16, #tpu.memory_space<vmem>>, vector<1x8x8x128xbf16>
    tpu.vector_store %arg8[%c0_79, %c0_80, %c0_81, %c0_82], %91 {strides = array<i32>} : memref<1x8x8x128xbf16, #tpu.memory_space<vmem>>, vector<1x8x8x128xbf16>,
    return
  }
  func.func @transform_0(%arg0: i32) -> (i32, i32, i32, i32) {
    %c0_i32 = arith.constant 0 : i32
    %c0_i32_0 = arith.constant 0 : i32
    %c0_i32_1 = arith.constant 0 : i32
    %c0_i32_2 = arith.constant 0 : i32
    return %arg0, %c0_i32, %c0_i32_0, %c0_i32_1 : i32, i32, i32, i32
  }
  func.func @transform_1(%arg0: i32) -> (i32, i32) {
    %c0_i32 = arith.constant 0 : i32
    %c0_i32_0 = arith.constant 0 : i32
    %c0_i32_1 = arith.constant 0 : i32
    return %c0_i32, %c0_i32_0 : i32, i32
  }
  func.func @transform_2(%arg0: i32) -> (i32, i32) {
    %c0_i32 = arith.constant 0 : i32
    %c0_i32_0 = arith.constant 0 : i32
    %c0_i32_1 = arith.constant 0 : i32
    return %c0_i32, %c0_i32_0 : i32, i32
  }
  func.func @transform_3(%arg0: i32) -> (i32, i32, i32) {
    %c0_i32 = arith.constant 0 : i32
    %c0_i32_0 = arith.constant 0 : i32
    %c0_i32_1 = arith.constant 0 : i32
    %c0_i32_2 = arith.constant 0 : i32
    return %c0_i32, %c0_i32_0, %c0_i32_1 : i32, i32, i32
  }
  func.func @transform_4(%arg0: i32) -> (i32, i32) {
    %c0_i32 = arith.constant 0 : i32
    %c0_i32_0 = arith.constant 0 : i32
    %c0_i32_1 = arith.constant 0 : i32
    return %c0_i32, %c0_i32_0 : i32, i32
  }
  func.func @transform_5(%arg0: i32) -> (i32, i32) {
    %c0_i32 = arith.constant 0 : i32
    %c0_i32_0 = arith.constant 0 : i32
    %c0_i32_1 = arith.constant 0 : i32
    return %c0_i32, %c0_i32_0 : i32, i32
  }
  func.func @transform_6(%arg0: i32) -> (i32, i32) {
    %c0_i32 = arith.constant 0 : i32
    %c0_i32_0 = arith.constant 0 : i32
    %c0_i32_1 = arith.constant 0 : i32
    return %c0_i32, %c0_i32_0 : i32, i32
  }
  func.func @transform_7(%arg0: i32) -> (i32, i32, i32, i32) {
    %c0_i32 = arith.constant 0 : i32
    %c0_i32_0 = arith.constant 0 : i32
    %c0_i32_1 = arith.constant 0 : i32
    %c0_i32_2 = arith.constant 0 : i32
    return %arg0, %c0_i32, %c0_i32_0, %c0_i32_1 : i32, i32, i32, i32
  }
}

</mosaic_0001>

<llo_original>
// kernel: bottleneck_forward.1
$region0: #{bottleneck_forward.1}
  #allocation0 [shape = 'u32[]', space=smem, size = 0x4, offset = 0x4, fixed_abs, tag = 'smem constant byte address 0x4 - core index']
  #allocation1 [shape = 'u32[72,128]{1,0:T(1,128)}', space=vmem, size = 0x9000, scoped, tag = 'internal scratch']
  #allocation2 [shape = 'f32[10,10,128]{2,1,0:T(8,128)}', space=vmem, size = 0x14000, scoped, tag = 'scratch operand']
  %s0 = inlined_call_operand.vmem [shape: bf16[2,8,8,128], index: 0, kind: input, shape index: {}]
  %s1 = inlined_call_operand.vmem [shape: bf16[128,128], index: 1, kind: input, shape index: {}]
  %s2 = inlined_call_operand.vmem [shape: f32[1,128], index: 2, kind: input, shape index: {}]
  %s3 = inlined_call_operand.hbm [shape: bf16[9,128,128], index: 3, kind: input, shape index: {}]
  %s4 = inlined_call_operand.vmem [shape: f32[1,128], index: 4, kind: input, shape index: {}]
  %s5 = inlined_call_operand.vmem [shape: bf16[128,128], index: 5, kind: input, shape index: {}]
  %s6 = inlined_call_operand.vmem [shape: f32[1,128], index: 6, kind: input, shape index: {}]
  %s7 = inlined_call_operand.vmem [shape: bf16[2,8,8,128], index: 7, kind: output, shape index: {}]
  %s8 = sld [smem:[#allocation0]]
  $region65: #{bottleneck_forward.1} parent=0
    _
  %s10 = ssub.s32 1, %s8
  %s11 = scalar_select 0, %s10, %s8
  $region1: #{bottleneck_forward.1} parent=0
    #allocation3 [shape = 'u8[294912]{0}', space=vmem, size = 0x48000, scoped, tag = 'input window, operand 3, single buffered']
    #allocation4 [shape = 's32[2]{0}', space=sflag, size = 0x8, scoped, tag = 'scoped memory for bottleneck_forward.1']
    %12 = vsyncpa [#allocation4], 0
    loop: start=0, step=1, limit=4
    $region2: #{bottleneck_forward.1} parent=1 // loop_pre_header
      _
    $region3: #{bottleneck_forward.1} parent=1 // loop_header
      %s14 = sphi 0, %s18
      %p15 = scmp.ge.s32.totalorder %s14, 4
      %s24 = sphi 0, %s26
      %s27 = sphi 0, %s24
      %s28 = sphi 0, %s27
      %s44 = sphi 0, %s28
      %s48 = sphi 0, %s48
      %s50 = sphi 0, %s48
      %s51 = sphi 0, %s50
      %s65 = sphi 0, %s51
      %s69 = sphi 0, %s69
      %s71 = sphi 0, %s69
      %s72 = sphi 0, %s71
      %s86 = sphi 0, %s72
      %s90 = sphi 0, %s90
      %s92 = sphi 0, %s90
      %s93 = sphi 0, %s92
      %s107 = sphi 0, %s93
      %s111 = sphi 0, %s111
      %s113 = sphi 0, %s111
      %s114 = sphi 0, %s113
      %s128 = sphi 0, %s114
      %s132 = sphi 0, %s132
      %s134 = sphi 0, %s132
      %s135 = sphi 0, %s134
      %s149 = sphi 0, %s135
      %s153 = sphi 0, %s153
      %s155 = sphi 0, %s153
      %s156 = sphi 0, %s155
      %s170 = sphi 0, %s156
      %s176 = sphi 0, %s178
      %s179 = sphi 0, %s176
      %s180 = sphi 0, %s179
      %s196 = sphi 0, %s180
    $region4: #{bottleneck_forward.1} parent=1 // loop_header_branch
      %17 = sbr.rel (%p15) target = $region8
    $region5: #{bottleneck_forward.1} parent=1 // loop_body
      %s19 = ssub.s32 %s14, 1
      %s20 = ssub.s32 %s14, 2
      %s21 = sadd.s32 %s14, 1
      %s22 = ssub.s32 %s14, %s21
      %p23 = scmp.eq.s32.totalorder %s22, 0
      %s25 = sadd.s32 %s24, 1
      %s26 = scalar_select %p23, %s24, %s25
      %p29 = pneg %p23
      %p30 = scmp.eq.s32.totalorder %s14, 1
      %p31 = por %p29, %p30
      %p32 = scmp.ne.s32.totalorder %s24, %s27
      %p33 = scmp.eq.s32.totalorder %s14, 0
      %p34 = por %p32, %p33
      %p35 = scmp.ne.s32.totalorder %s24, %s27
      %p36 = scmp.eq.s32.totalorder %s19, 1
      %p37 = por %p35, %p36
      %p38 = scmp.ne.s32.totalorder %s27, %s28
      %p39 = scmp.eq.s32.totalorder %s19, 0
      %p40 = por %p38, %p39
      %p41 = scmp.ne.s32.totalorder %s27, %s28
      %p42 = scmp.eq.s32.totalorder %s20, 1
      %p43 = por %p41, %p42
      %p45 = scmp.ne.s32.totalorder %s28, %s44
      %p46 = scmp.eq.s32.totalorder %s20, 0
      %p47 = por %p45, %p46
      %s49 = sadd.s32 %s48, 1
      %p52 = scmp.eq.s32.totalorder %s14, 1
      %p53 = scmp.ne.s32.totalorder %s48, %s50
      %p54 = scmp.eq.s32.totalorder %s14, 0
      %p55 = por %p53, %p54
      %p56 = scmp.ne.s32.totalorder %s48, %s50
      %p57 = scmp.eq.s32.totalorder %s19, 1
      %p58 = por %p56, %p57
      %p59 = scmp.ne.s32.totalorder %s50, %s51
      %p60 = scmp.eq.s32.totalorder %s19, 0
      %p61 = por %p59, %p60
      %p62 = scmp.ne.s32.totalorder %s50, %s51
      %p63 = scmp.eq.s32.totalorder %s20, 1
      %p64 = por %p62, %p63
      %p66 = scmp.ne.s32.totalorder %s51, %s65
      %p67 = scmp.eq.s32.totalorder %s20, 0
      %p68 = por %p66, %p67
      %s70 = sadd.s32 %s69, 1
      %p73 = scmp.eq.s32.totalorder %s14, 1
      %p74 = scmp.ne.s32.totalorder %s69, %s71
      %p75 = scmp.eq.s32.totalorder %s14, 0
      %p76 = por %p74, %p75
      %p77 = scmp.ne.s32.totalorder %s69, %s71
      %p78 = scmp.eq.s32.totalorder %s19, 1
      %p79 = por %p77, %p78
      %p80 = scmp.ne.s32.totalorder %s71, %s72
      %p81 = scmp.eq.s32.totalorder %s19, 0
      %p82 = por %p80, %p81
      %p83 = scmp.ne.s32.totalorder %s71, %s72
      %p84 = scmp.eq.s32.totalorder %s20, 1
      %p85 = por %p83, %p84
      %p87 = scmp.ne.s32.totalorder %s72, %s86
      %p88 = scmp.eq.s32.totalorder %s20, 0
      %p89 = por %p87, %p88
      %s91 = sadd.s32 %s90, 1
      %p94 = scmp.eq.s32.totalorder %s14, 1
      %p95 = scmp.ne.s32.totalorder %s90, %s92
      %p96 = scmp.eq.s32.totalorder %s14, 0
      %p97 = por %p95, %p96
      %p98 = scmp.ne.s32.totalorder %s90, %s92
      %p99 = scmp.eq.s32.totalorder %s19, 1
      %p100 = por %p98, %p99
      %p101 = scmp.ne.s32.totalorder %s92, %s93
      %p102 = scmp.eq.s32.totalorder %s19, 0
      %p103 = por %p101, %p102
      %p104 = scmp.ne.s32.totalorder %s92, %s93
      %p105 = scmp.eq.s32.totalorder %s20, 1
      %p106 = por %p104, %p105
      %p108 = scmp.ne.s32.totalorder %s93, %s107
      %p109 = scmp.eq.s32.totalorder %s20, 0
      %p110 = por %p108, %p109
      %s112 = sadd.s32 %s111, 1
      %p115 = scmp.eq.s32.totalorder %s14, 1
      %p116 = scmp.ne.s32.totalorder %s111, %s113
      %p117 = scmp.eq.s32.totalorder %s14, 0
      %p118 = por %p116, %p117
      %p119 = scmp.ne.s32.totalorder %s111, %s113
      %p120 = scmp.eq.s32.totalorder %s19, 1
      %p121 = por %p119, %p120
      %p122 = scmp.ne.s32.totalorder %s113, %s114
      %p123 = scmp.eq.s32.totalorder %s19, 0
      %p124 = por %p122, %p123
      %p125 = scmp.ne.s32.totalorder %s113, %s114
      %p126 = scmp.eq.s32.totalorder %s20, 1
      %p127 = por %p125, %p126
      %p129 = scmp.ne.s32.totalorder %s114, %s128
      %p130 = scmp.eq.s32.totalorder %s20, 0
      %p131 = por %p129, %p130
      %s133 = sadd.s32 %s132, 1
      %p136 = scmp.eq.s32.totalorder %s14, 1
      %p137 = scmp.ne.s32.totalorder %s132, %s134
      %p138 = scmp.eq.s32.totalorder %s14, 0
      %p139 = por %p137, %p138
      %p140 = scmp.ne.s32.totalorder %s132, %s134
      %p141 = scmp.eq.s32.totalorder %s19, 1
      %p142 = por %p140, %p141
      %p143 = scmp.ne.s32.totalorder %s134, %s135
      %p144 = scmp.eq.s32.totalorder %s19, 0
      %p145 = por %p143, %p144
      %p146 = scmp.ne.s32.totalorder %s134, %s135
      %p147 = scmp.eq.s32.totalorder %s20, 1
      %p148 = por %p146, %p147
      %p150 = scmp.ne.s32.totalorder %s135, %s149
      %p151 = scmp.eq.s32.totalorder %s20, 0
      %p152 = por %p150, %p151
      %s154 = sadd.s32 %s153, 1
      %p157 = scmp.eq.s32.totalorder %s14, 1
      %p158 = scmp.ne.s32.totalorder %s153, %s155
      %p159 = scmp.eq.s32.totalorder %s14, 0
      %p160 = por %p158, %p159
      %p161 = scmp.ne.s32.totalorder %s153, %s155
      %p162 = scmp.eq.s32.totalorder %s19, 1
      %p163 = por %p161, %p162
      %p164 = scmp.ne.s32.totalorder %s155, %s156
      %p165 = scmp.eq.s32.totalorder %s19, 0
      %p166 = por %p164, %p165
      %p167 = scmp.ne.s32.totalorder %s155, %s156
      %p168 = scmp.eq.s32.totalorder %s20, 1
      %p169 = por %p167, %p168
      %p171 = scmp.ne.s32.totalorder %s156, %s170
      %p172 = scmp.eq.s32.totalorder %s20, 0
      %p173 = por %p171, %p172
      %s174 = ssub.s32 %s14, %s21
      %p175 = scmp.eq.s32.totalorder %s174, 0
      %s177 = sadd.s32 %s176, 1
      %s178 = scalar_select %p175, %s176, %s177
      %p181 = pneg %p175
      %p182 = scmp.eq.s32.totalorder %s14, 1
      %p183 = por %p181, %p182
      %p184 = scmp.ne.s32.totalorder %s176, %s179
      %p185 = scmp.eq.s32.totalorder %s14, 0
      %p186 = por %p184, %p185
      %p187 = scmp.ne.s32.totalorder %s176, %s179
      %p188 = scmp.eq.s32.totalorder %s19, 1
      %p189 = por %p187, %p188
      %p190 = scmp.ne.s32.totalorder %s179, %s180
      %p191 = scmp.eq.s32.totalorder %s19, 0
      %p192 = por %p190, %p191
      %p193 = scmp.ne.s32.totalorder %s179, %s180
      %p194 = scmp.eq.s32.totalorder %s20, 1
      %p195 = por %p193, %p194
      %p197 = scmp.ne.s32.totalorder %s180, %s196
      %p198 = scmp.eq.s32.totalorder %s20, 0
      %p199 = por %p197, %p198
      %p200 = scmp.le.s32.totalorder 1, %s14
      %p201 = scmp.lt.s32.totalorder %s14, 3
      %p202 = pnand %p200, %p201
      %p203 = pneg %p202
      // Predicated region
      $region9: #{bottleneck_forward.1} parent=5 // pred_check
        _
      $region10: #{bottleneck_forward.1} parent=5 // pred_check_branch
        %205 = sbr.rel (%p202) target = $region12
      $region11: #{bottleneck_forward.1} parent=5 // pred_region
        %s206 = ssub.s32 %s14, 1
        // Predicated region
        $region13: #{bottleneck_forward.1} parent=11 // pred_check
          %p207 = pneg %p61
        $region14: #{bottleneck_forward.1} parent=11 // pred_check_branch
          %209 = sbr.rel (%p207) target = $region16
        $region15: #{bottleneck_forward.1} parent=11 // pred_region
          _
        $region16: #{bottleneck_forward.1} parent=11 // pred_fallthru
          _
        // Predicated region
        $region17: #{bottleneck_forward.1} parent=11 // pred_check
          %p210 = pneg %p82
        $region18: #{bottleneck_forward.1} parent=11 // pred_check_branch
          %212 = sbr.rel (%p210) target = $region20
        $region19: #{bottleneck_forward.1} parent=11 // pred_region
          _
        $region20: #{bottleneck_forward.1} parent=11 // pred_fallthru
          _
        // Predicated region
        $region21: #{bottleneck_forward.1} parent=11 // pred_check
          %p213 = pneg %p103
        $region22: #{bottleneck_forward.1} parent=11 // pred_check_branch
          %215 = sbr.rel (%p213) target = $region24
        $region23: #{bottleneck_forward.1} parent=11 // pred_region
          %217 = vsyncadd [#allocation4], 0
          %s218 = sshll.u32 %s3, 4
          %s219 = int_to_ptr.hbm [resolvable:$true] %s218
          %s220 = sshll.u32 [#allocation3], 4
          %s221 = int_to_ptr.vmem [resolvable:$true] %s220
          %226 = dma.hbm_to_vmem [thread:$0]  %s219, 9216, %s221, [#allocation4], 64, 64, 4
        $region24: #{bottleneck_forward.1} parent=11 // pred_fallthru
          _
        // Predicated region
        $region25: #{bottleneck_forward.1} parent=11 // pred_check
          %p227 = pneg %p124
        $region26: #{bottleneck_forward.1} parent=11 // pred_check_branch
          %229 = sbr.rel (%p227) target = $region28
        $region27: #{bottleneck_forward.1} parent=11 // pred_region
          _
        $region28: #{bottleneck_forward.1} parent=11 // pred_fallthru
          _
        // Predicated region
        $region29: #{bottleneck_forward.1} parent=11 // pred_check
          %p230 = pneg %p145
        $region30: #{bottleneck_forward.1} parent=11 // pred_check_branch
          %232 = sbr.rel (%p230) target = $region32
        $region31: #{bottleneck_forward.1} parent=11 // pred_region
          _
        $region32: #{bottleneck_forward.1} parent=11 // pred_fallthru
          _
        // Predicated region
        $region33: #{bottleneck_forward.1} parent=11 // pred_check
          %p233 = pneg %p166
        $region34: #{bottleneck_forward.1} parent=11 // pred_check_branch
          %235 = sbr.rel (%p233) target = $region36
        $region35: #{bottleneck_forward.1} parent=11 // pred_region
          _
        $region36: #{bottleneck_forward.1} parent=11 // pred_fallthru
          _
      $region12: #{bottleneck_forward.1} parent=5 // pred_fallthru
        _
      %p236 = scmp.lt.s32.totalorder %s14, 2
      // Predicated region
      $region37: #{bottleneck_forward.1} parent=5 // pred_check
        %p237 = pneg %p236
      $region38: #{bottleneck_forward.1} parent=5 // pred_check_branch
        %239 = sbr.rel (%p237) target = $region40
      $region39: #{bottleneck_forward.1} parent=5 // pred_region
        // Predicated region
        $region41: #{bottleneck_forward.1} parent=39 // pred_check
          %p240 = pneg %p34
        $region42: #{bottleneck_forward.1} parent=39 // pred_check_branch
          %242 = sbr.rel (%p240) target = $region44
        $region43: #{bottleneck_forward.1} parent=39 // pred_region
          %p243 = scmp.lt.s32.totalorder %s14, 1
          %s244 = scalar_select %p243, %s14, 1
          %s245 = smul.addr %s244, 8
          %s246 = smul.addr %s245, 4
          %s247 = scalar_lea.vmem %s0, %s246
        $region44: #{bottleneck_forward.1} parent=39 // pred_fallthru
          _
      $region40: #{bottleneck_forward.1} parent=5 // pred_fallthru
        _
      %p248 = scmp.le.s32.totalorder 1, %s14
      %p249 = scmp.lt.s32.totalorder %s14, 3
      %p250 = pnand %p248, %p249
      %p251 = pneg %p250
      // Predicated region
      $region45: #{bottleneck_forward.1} parent=5 // pred_check
        _
      $region46: #{bottleneck_forward.1} parent=5 // pred_check_branch
        %253 = sbr.rel (%p250) target = $region48
      $region47: #{bottleneck_forward.1} parent=5 // pred_region
        %s254 = ssub.s32 %s14, 1
        // Predicated region
        $region49: #{bottleneck_forward.1} parent=47 // pred_check
          %p255 = pneg %p103
        $region50: #{bottleneck_forward.1} parent=47 // pred_check_branch
          %257 = sbr.rel (%p255) target = $region52
        $region51: #{bottleneck_forward.1} parent=47 // pred_region
          %259 = dma.done [#allocation4], 9216
        $region52: #{bottleneck_forward.1} parent=47 // pred_fallthru
          _
        %p260 = scmp.lt.s32.totalorder %s19, 1
        %s261 = scalar_select %p260, %s19, 1
        %s262 = smul.addr %s261, 8
        %s263 = smul.addr %s262, 4
        %s264 = scalar_lea.vmem %s0, %s263
        %p265 = pneg %p40
        %p266 = pneg %p37
        %p267 = pneg %p61
        %p268 = pneg %p58
        %p269 = pneg %p82
        %p270 = pneg %p79
        %p271 = pneg %p103
        %p272 = pneg %p100
        %p273 = pneg %p124
        %p274 = pneg %p121
        %p275 = pneg %p145
        %p276 = pneg %p142
        %p277 = pneg %p166
        %p278 = pneg %p163
        %p279 = pneg %p192
        %p280 = pneg %p189
        %p281 = scmp.lt.s32.totalorder %s19, 1
        %s282 = scalar_select %p281, %s19, 1
        %s283 = smul.addr %s282, 8
        %s284 = smul.addr %s283, 4
        %s285 = scalar_lea.vmem %s7, %s284
        %p286 = scmp.lt.s32.totalorder %s19, 1
        %s287 = scalar_select %p286, %s19, 1
        %s288 = smul.addr %s287, 8
        %s289 = smul.addr %s288, 4
        %s290 = scalar_lea.vmem %s0, %s289
        %p291 = scmp.lt.s32.totalorder %s19, 1
        %s292 = scalar_select %p291, %s19, 1
        %s293 = smul.addr %s292, 8
        %s294 = smul.addr %s293, 4
        %s295 = scalar_lea.vmem %s7, %s294
        %v296 = vld [vmem:[%s290] sm:$0xf]
        %v297 = vld [vmem:[%s290 + $0x4] sm:$0xf]
        %v298 = vld [vmem:[%s290 + $0x8] sm:$0xf]
        %v299 = vld [vmem:[%s290 + $0xc] sm:$0xf]
        %v300 = vld [vmem:[%s290 + $0x10] sm:$0xf]
        %v301 = vld [vmem:[%s290 + $0x14] sm:$0xf]
        %v302 = vld [vmem:[%s290 + $0x18] sm:$0xf]
        %v303 = vld [vmem:[%s290 + $0x1c] sm:$0xf]
        %v304 = vld [vmem:[%s1] sm:$0xf]
        %v305 = vld [vmem:[%s1 + $0x4] sm:$0xf]
        %v306 = vld [vmem:[%s1 + $0x8] sm:$0xf]
        %v307 = vld [vmem:[%s1 + $0xc] sm:$0xf]
        %v308 = vld [vmem:[%s1 + $0x10] sm:$0xf]
        %v309 = vld [vmem:[%s1 + $0x14] sm:$0xf]
        %v310 = vld [vmem:[%s1 + $0x18] sm:$0xf]
        %v311 = vld [vmem:[%s1 + $0x1c] sm:$0xf]
        %v312 = vld [vmem:[%s1 + $0x20] sm:$0xf]
        %v313 = vld [vmem:[%s1 + $0x24] sm:$0xf]
        %v314 = vld [vmem:[%s1 + $0x28] sm:$0xf]
        %v315 = vld [vmem:[%s1 + $0x2c] sm:$0xf]
        %v316 = vld [vmem:[%s1 + $0x30] sm:$0xf]
        %v317 = vld [vmem:[%s1 + $0x34] sm:$0xf]
        %v318 = vld [vmem:[%s1 + $0x38] sm:$0xf]
        %v319 = vld [vmem:[%s1 + $0x3c] sm:$0xf]
        %v320 = vld [vmem:[%s2] sm:$0x1]
        %v322 = vperm.slane %v320, 0
        %v332 = vunpack.c.l.b16 %v296
        %v333 = vunpack.c.l.b16 %v297
        %v334 = vunpack.c.l.b16 %v298
        %v335 = vunpack.c.l.b16 %v299
        %v336 = vunpack.c.l.b16 %v300
        %v337 = vunpack.c.l.b16 %v301
        %v338 = vunpack.c.l.b16 %v302
        %v339 = vunpack.c.l.b16 %v303
        %v340 = vpack.c.b16 %v333, %v332
        %v341 = vpack.c.b16 %v335, %v334
        %v342 = vpack.c.b16 %v337, %v336
        %v343 = vpack.c.b16 %v339, %v338
        %v364 = vunpack.c.l.b16 %v304
        %v365 = vunpack.c.l.b16 %v305
        %v366 = vunpack.c.l.b16 %v306
        %v367 = vunpack.c.l.b16 %v307
        %v368 = vunpack.c.l.b16 %v308
        %v369 = vunpack.c.l.b16 %v309
        %v370 = vunpack.c.l.b16 %v310
        %v371 = vunpack.c.l.b16 %v311
        %v372 = vunpack.c.l.b16 %v312
        %v373 = vunpack.c.l.b16 %v313
        %v374 = vunpack.c.l.b16 %v314
        %v375 = vunpack.c.l.b16 %v315
        %v376 = vunpack.c.l.b16 %v316
        %v377 = vunpack.c.l.b16 %v317
        %v378 = vunpack.c.l.b16 %v318
        %v379 = vunpack.c.l.b16 %v319
        %v380 = vpack.c.b16 %v365, %v364
        %v381 = vpack.c.b16 %v367, %v366
        %v382 = vpack.c.b16 %v369, %v368
        %v383 = vpack.c.b16 %v371, %v370
        %v384 = vpack.c.b16 %v373, %v372
        %v385 = vpack.c.b16 %v375, %v374
        %v386 = vpack.c.b16 %v377, %v376
        %v387 = vpack.c.b16 %v379, %v378
        %396 = vmatpush.bf16.msra.mxu0 %v387
        %397 = vmatpush.bf16.msra.mxu0 %v386
        %398 = vmatpush.bf16.msra.mxu0 %v385
        %399 = vmatpush.bf16.msra.mxu0 %v384
        %400 = vmatpush.bf16.msra.mxu0 %v383
        %401 = vmatpush.bf16.msra.mxu0 %v382
        %402 = vmatpush.bf16.msra.mxu0 %v381
        %403 = vmatpush.bf16.msra.mxu0 %v380
        %404 = vmatmul.bf16.gmra.mxu0 %v340
        %v405 = vpop.f32.mrf.mxu0
        %v406 = vadd.f32 %v322, %v405
        %v407 = vpop.f32.mrf.mxu0
        %v408 = vadd.f32 %v322, %v407
        %409 = vmatmul.bf16.gmra.mxu0 %v341
        %v410 = vpop.f32.mrf.mxu0
        %v411 = vadd.f32 %v322, %v410
        %v412 = vpop.f32.mrf.mxu0
        %v413 = vadd.f32 %v322, %v412
        %414 = vmatmul.bf16.gmra.mxu0 %v342
        %v415 = vpop.f32.mrf.mxu0
        %v416 = vadd.f32 %v322, %v415
        %v417 = vpop.f32.mrf.mxu0
        %v418 = vadd.f32 %v322, %v417
        %419 = vmatmul.bf16.gmra.mxu0 %v343
        %v420 = vpop.f32.mrf.mxu0
        %v421 = vadd.f32 %v322, %v420
        %v422 = vpop.f32.mrf.mxu0
        %v423 = vadd.f32 %v322, %v422
        %424 = vdwg.mxu0
        %v425 = vmax.f32 %v406, 0.0
        %v426 = vmax.f32 %v408, 0.0
        %v427 = vmax.f32 %v411, 0.0
        %v428 = vmax.f32 %v413, 0.0
        %v429 = vmax.f32 %v416, 0.0
        %v430 = vmax.f32 %v418, 0.0
        %v431 = vmax.f32 %v421, 0.0
        %v432 = vmax.f32 %v423, 0.0
        %433 = vst [vmem:[#allocation2] sm:$0xff] 0.0
        %434 = vst [vmem:[#allocation2 + $0x8] sm:$0x3] 0.0
        %435 = vst [vmem:[#allocation2 + $0x10] sm:$0xff] 0.0
        %436 = vst [vmem:[#allocation2 + $0x18] sm:$0x3] 0.0
        %437 = vst [vmem:[#allocation2 + $0x20] sm:$0xff] 0.0
        %438 = vst [vmem:[#allocation2 + $0x28] sm:$0x3] 0.0
        %439 = vst [vmem:[#allocation2 + $0x30] sm:$0xff] 0.0
        %440 = vst [vmem:[#allocation2 + $0x38] sm:$0x3] 0.0
        %441 = vst [vmem:[#allocation2 + $0x40] sm:$0xff] 0.0
        %442 = vst [vmem:[#allocation2 + $0x48] sm:$0x3] 0.0
        %443 = vst [vmem:[#allocation2 + $0x50] sm:$0xff] 0.0
        %444 = vst [vmem:[#allocation2 + $0x58] sm:$0x3] 0.0
        %445 = vst [vmem:[#allocation2 + $0x60] sm:$0xff] 0.0
        %446 = vst [vmem:[#allocation2 + $0x68] sm:$0x3] 0.0
        %447 = vst [vmem:[#allocation2 + $0x70] sm:$0xff] 0.0
        %448 = vst [vmem:[#allocation2 + $0x78] sm:$0x3] 0.0
        %449 = vst [vmem:[#allocation2 + $0x80] sm:$0xff] 0.0
        %450 = vst [vmem:[#allocation2 + $0x88] sm:$0x3] 0.0
        %451 = vst [vmem:[#allocation2 + $0x90] sm:$0xff] 0.0
        %452 = vst [vmem:[#allocation2 + $0x98] sm:$0x3] 0.0
        %s453 = scalar_lea.vmem [#allocation2], 16
        %454 = vst [vmem:[%s453 + $0x1] sm:$0xff] %v425
        %455 = vst [vmem:[%s453 + $0x11] sm:$0xff] %v426
        %456 = vst [vmem:[%s453 + $0x21] sm:$0xff] %v427
        %457 = vst [vmem:[%s453 + $0x31] sm:$0xff] %v428
        %458 = vst [vmem:[%s453 + $0x41] sm:$0xff] %v429
        %459 = vst [vmem:[%s453 + $0x51] sm:$0xff] %v430
        %460 = vst [vmem:[%s453 + $0x61] sm:$0xff] %v431
        %461 = vst [vmem:[%s453 + $0x71] sm:$0xff] %v432
        %v462 = vld [vmem:[#allocation2] sm:$0xff]
        %v463 = vld [vmem:[#allocation2 + $0x10] sm:$0xff]
        %v464 = vld [vmem:[#allocation2 + $0x20] sm:$0xff]
        %v465 = vld [vmem:[#allocation2 + $0x30] sm:$0xff]
        %v466 = vld [vmem:[#allocation2 + $0x40] sm:$0xff]
        %v467 = vld [vmem:[#allocation2 + $0x50] sm:$0xff]
        %v468 = vld [vmem:[#allocation2 + $0x60] sm:$0xff]
        %v469 = vld [vmem:[#allocation2 + $0x70] sm:$0xff]
        %v470 = vpack.c.bf16 %v463, %v462
        %v471 = vpack.c.bf16 %v465, %v464
        %v472 = vpack.c.bf16 %v467, %v466
        %v473 = vpack.c.bf16 %v469, %v468
        %v474 = vld [vmem:[#allocation3] sm:$0xf]
        %v475 = vld [vmem:[#allocation3 + $0x4] sm:$0xf]
        %v476 = vld [vmem:[#allocation3 + $0x8] sm:$0xf]
        %v477 = vld [vmem:[#allocation3 + $0xc] sm:$0xf]
        %v478 = vld [vmem:[#allocation3 + $0x10] sm:$0xf]
        %v479 = vld [vmem:[#allocation3 + $0x14] sm:$0xf]
        %v480 = vld [vmem:[#allocation3 + $0x18] sm:$0xf]
        %v481 = vld [vmem:[#allocation3 + $0x1c] sm:$0xf]
        %v482 = vld [vmem:[#allocation3 + $0x20] sm:$0xf]
        %v483 = vld [vmem:[#allocation3 + $0x24] sm:$0xf]
        %v484 = vld [vmem:[#allocation3 + $0x28] sm:$0xf]
        %v485 = vld [vmem:[#allocation3 + $0x2c] sm:$0xf]
        %v486 = vld [vmem:[#allocation3 + $0x30] sm:$0xf]
        %v487 = vld [vmem:[#allocation3 + $0x34] sm:$0xf]
        %v488 = vld [vmem:[#allocation3 + $0x38] sm:$0xf]
        %v489 = vld [vmem:[#allocation3 + $0x3c] sm:$0xf]
        %v490 = vld [vmem:[#allocation2 + $0x1] sm:$0xff]
        %v491 = vld [vmem:[#allocation2 + $0x11] sm:$0xff]
        %v492 = vld [vmem:[#allocation2 + $0x21] sm:$0xff]
        %v493 = vld [vmem:[#allocation2 + $0x31] sm:$0xff]
        %v494 = vld [vmem:[#allocation2 + $0x41] sm:$0xff]
        %v495 = vld [vmem:[#allocation2 + $0x51] sm:$0xff]
        %v496 = vld [vmem:[#allocation2 + $0x61] sm:$0xff]
        %v497 = vld [vmem:[#allocation2 + $0x71] sm:$0xff]
        %v498 = vpack.c.bf16 %v491, %v490
        %v499 = vpack.c.bf16 %v493, %v492
        %v500 = vpack.c.bf16 %v495, %v494
        %v501 = vpack.c.bf16 %v497, %v496
        %s502 = scalar_lea.vmem [#allocation3], 64
        %v503 = vld [vmem:[%s502] sm:$0xf]
        %v504 = vld [vmem:[%s502 + $0x4] sm:$0xf]
        %v505 = vld [vmem:[%s502 + $0x8] sm:$0xf]
        %v506 = vld [vmem:[%s502 + $0xc] sm:$0xf]
        %v507 = vld [vmem:[%s502 + $0x10] sm:$0xf]
        %v508 = vld [vmem:[%s502 + $0x14] sm:$0xf]
        %v509 = vld [vmem:[%s502 + $0x18] sm:$0xf]
        %v510 = vld [vmem:[%s502 + $0x1c] sm:$0xf]
        %v511 = vld [vmem:[%s502 + $0x20] sm:$0xf]
        %v512 = vld [vmem:[%s502 + $0x24] sm:$0xf]
        %v513 = vld [vmem:[%s502 + $0x28] sm:$0xf]
        %v514 = vld [vmem:[%s502 + $0x2c] sm:$0xf]
        %v515 = vld [vmem:[%s502 + $0x30] sm:$0xf]
        %v516 = vld [vmem:[%s502 + $0x34] sm:$0xf]
        %v517 = vld [vmem:[%s502 + $0x38] sm:$0xf]
        %v518 = vld [vmem:[%s502 + $0x3c] sm:$0xf]
        %v535 = vunpack.c.l.b16 %v503
        %v536 = vunpack.c.l.b16 %v504
        %v537 = vunpack.c.l.b16 %v505
        %v538 = vunpack.c.l.b16 %v506
        %v539 = vunpack.c.l.b16 %v507
        %v540 = vunpack.c.l.b16 %v508
        %v541 = vunpack.c.l.b16 %v509
        %v542 = vunpack.c.l.b16 %v510
        %v543 = vunpack.c.l.b16 %v511
        %v544 = vunpack.c.l.b16 %v512
        %v545 = vunpack.c.l.b16 %v513
        %v546 = vunpack.c.l.b16 %v514
        %v547 = vunpack.c.l.b16 %v515
        %v548 = vunpack.c.l.b16 %v516
        %v549 = vunpack.c.l.b16 %v517
        %v550 = vunpack.c.l.b16 %v518
        %v551 = vpack.c.b16 %v536, %v535
        %v552 = vpack.c.b16 %v538, %v537
        %v553 = vpack.c.b16 %v540, %v539
        %v554 = vpack.c.b16 %v542, %v541
        %v555 = vpack.c.b16 %v544, %v543
        %v556 = vpack.c.b16 %v546, %v545
        %v557 = vpack.c.b16 %v548, %v547
        %v558 = vpack.c.b16 %v550, %v549
        %567 = vmatpush.bf16.msra.mxu0 %v558
        %568 = vmatpush.bf16.msra.mxu0 %v557
        %569 = vmatpush.bf16.msra.mxu0 %v556
        %570 = vmatpush.bf16.msra.mxu0 %v555
        %571 = vmatpush.bf16.msra.mxu0 %v554
        %572 = vmatpush.bf16.msra.mxu0 %v553
        %573 = vmatpush.bf16.msra.mxu0 %v552
        %574 = vmatpush.bf16.msra.mxu0 %v551
        %575 = vmatmul.bf16.gmra.mxu0 %v498
        %v576 = vpop.f32.mrf.mxu0
        %v577 = vadd.f32 0.0, %v576
        %v578 = vpop.f32.mrf.mxu0
        %v579 = vadd.f32 0.0, %v578
        %580 = vmatmul.bf16.gmra.mxu0 %v499
        %v581 = vpop.f32.mrf.mxu0
        %v582 = vadd.f32 0.0, %v581
        %v583 = vpop.f32.mrf.mxu0
        %v584 = vadd.f32 0.0, %v583
        %585 = vmatmul.bf16.gmra.mxu0 %v500
        %v586 = vpop.f32.mrf.mxu0
        %v587 = vadd.f32 0.0, %v586
        %v588 = vpop.f32.mrf.mxu0
        %v589 = vadd.f32 0.0, %v588
        %590 = vmatmul.bf16.gmra.mxu0 %v501
        %v591 = vpop.f32.mrf.mxu0
        %v592 = vadd.f32 0.0, %v591
        %v593 = vpop.f32.mrf.mxu0
        %v594 = vadd.f32 0.0, %v593
        %595 = vdwg.mxu0
        %v612 = vunpack.c.l.b16 %v474
        %v613 = vunpack.c.l.b16 %v475
        %v614 = vunpack.c.l.b16 %v476
        %v615 = vunpack.c.l.b16 %v477
        %v616 = vunpack.c.l.b16 %v478
        %v617 = vunpack.c.l.b16 %v479
        %v618 = vunpack.c.l.b16 %v480
        %v619 = vunpack.c.l.b16 %v481
        %v620 = vunpack.c.l.b16 %v482
        %v621 = vunpack.c.l.b16 %v483
        %v622 = vunpack.c.l.b16 %v484
        %v623 = vunpack.c.l.b16 %v485
        %v624 = vunpack.c.l.b16 %v486
        %v625 = vunpack.c.l.b16 %v487
        %v626 = vunpack.c.l.b16 %v488
        %v627 = vunpack.c.l.b16 %v489
        %v628 = vpack.c.b16 %v613, %v612
        %v629 = vpack.c.b16 %v615, %v614
        %v630 = vpack.c.b16 %v617, %v616
        %v631 = vpack.c.b16 %v619, %v618
        %v632 = vpack.c.b16 %v621, %v620
        %v633 = vpack.c.b16 %v623, %v622
        %v634 = vpack.c.b16 %v625, %v624
        %v635 = vpack.c.b16 %v627, %v626
        %644 = vmatpush.bf16.msra.mxu0 %v635
        %645 = vmatpush.bf16.msra.mxu0 %v634
        %646 = vmatpush.bf16.msra.mxu0 %v633
        %647 = vmatpush.bf16.msra.mxu0 %v632
        %648 = vmatpush.bf16.msra.mxu0 %v631
        %649 = vmatpush.bf16.msra.mxu0 %v630
        %650 = vmatpush.bf16.msra.mxu0 %v629
        %651 = vmatpush.bf16.msra.mxu0 %v628
        %652 = vmatmul.bf16.gmra.mxu0 %v470
        %v653 = vpop.f32.mrf.mxu0
        %v654 = vadd.f32 %v577, %v653
        %v655 = vpop.f32.mrf.mxu0
        %v656 = vadd.f32 %v579, %v655
        %657 = vmatmul.bf16.gmra.mxu0 %v471
        %v658 = vpop.f32.mrf.mxu0
        %v659 = vadd.f32 %v582, %v658
        %v660 = vpop.f32.mrf.mxu0
        %v661 = vadd.f32 %v584, %v660
        %662 = vmatmul.bf16.gmra.mxu0 %v472
        %v663 = vpop.f32.mrf.mxu0
        %v664 = vadd.f32 %v587, %v663
        %v665 = vpop.f32.mrf.mxu0
        %v666 = vadd.f32 %v589, %v665
        %667 = vmatmul.bf16.gmra.mxu0 %v473
        %v668 = vpop.f32.mrf.mxu0
        %v669 = vadd.f32 %v592, %v668
        %v670 = vpop.f32.mrf.mxu0
        %v671 = vadd.f32 %v594, %v670
        %672 = vdwg.mxu0
        %v673 = vld [vmem:[#allocation2 + $0x2] sm:$0xff]
        %v674 = vld [vmem:[#allocation2 + $0x12] sm:$0xff]
        %v675 = vld [vmem:[#allocation2 + $0x22] sm:$0xff]
        %v676 = vld [vmem:[#allocation2 + $0x32] sm:$0xff]
        %v677 = vld [vmem:[#allocation2 + $0x42] sm:$0xff]
        %v678 = vld [vmem:[#allocation2 + $0x52] sm:$0xff]
        %v679 = vld [vmem:[#allocation2 + $0x62] sm:$0xff]
        %v680 = vld [vmem:[#allocation2 + $0x72] sm:$0xff]
        %v681 = vpack.c.bf16 %v674, %v673
        %v682 = vpack.c.bf16 %v676, %v675
        %v683 = vpack.c.bf16 %v678, %v677
        %v684 = vpack.c.bf16 %v680, %v679
        %s685 = scalar_lea.vmem [#allocation3], 128
        %v686 = vld [vmem:[%s685] sm:$0xf]
        %v687 = vld [vmem:[%s685 + $0x4] sm:$0xf]
        %v688 = vld [vmem:[%s685 + $0x8] sm:$0xf]
        %v689 = vld [vmem:[%s685 + $0xc] sm:$0xf]
        %v690 = vld [vmem:[%s685 + $0x10] sm:$0xf]
        %v691 = vld [vmem:[%s685 + $0x14] sm:$0xf]
        %v692 = vld [vmem:[%s685 + $0x18] sm:$0xf]
        %v693 = vld [vmem:[%s685 + $0x1c] sm:$0xf]
        %v694 = vld [vmem:[%s685 + $0x20] sm:$0xf]
        %v695 = vld [vmem:[%s685 + $0x24] sm:$0xf]
        %v696 = vld [vmem:[%s685 + $0x28] sm:$0xf]
        %v697 = vld [vmem:[%s685 + $0x2c] sm:$0xf]
        %v698 = vld [vmem:[%s685 + $0x30] sm:$0xf]
        %v699 = vld [vmem:[%s685 + $0x34] sm:$0xf]
        %v700 = vld [vmem:[%s685 + $0x38] sm:$0xf]
        %v701 = vld [vmem:[%s685 + $0x3c] sm:$0xf]
        %v718 = vunpack.c.l.b16 %v686
        %v719 = vunpack.c.l.b16 %v687
        %v720 = vunpack.c.l.b16 %v688
        %v721 = vunpack.c.l.b16 %v689
        %v722 = vunpack.c.l.b16 %v690
        %v723 = vunpack.c.l.b16 %v691
        %v724 = vunpack.c.l.b16 %v692
        %v725 = vunpack.c.l.b16 %v693
        %v726 = vunpack.c.l.b16 %v694
        %v727 = vunpack.c.l.b16 %v695
        %v728 = vunpack.c.l.b16 %v696
        %v729 = vunpack.c.l.b16 %v697
        %v730 = vunpack.c.l.b16 %v698
        %v731 = vunpack.c.l.b16 %v699
        %v732 = vunpack.c.l.b16 %v700
        %v733 = vunpack.c.l.b16 %v701
        %v734 = vpack.c.b16 %v719, %v718
        %v735 = vpack.c.b16 %v721, %v720
        %v736 = vpack.c.b16 %v723, %v722
        %v737 = vpack.c.b16 %v725, %v724
        %v738 = vpack.c.b16 %v727, %v726
        %v739 = vpack.c.b16 %v729, %v728
        %v740 = vpack.c.b16 %v731, %v730
        %v741 = vpack.c.b16 %v733, %v732
        %750 = vmatpush.bf16.msra.mxu0 %v741
        %751 = vmatpush.bf16.msra.mxu0 %v740
        %752 = vmatpush.bf16.msra.mxu0 %v739
        %753 = vmatpush.bf16.msra.mxu0 %v738
        %754 = vmatpush.bf16.msra.mxu0 %v737
        %755 = vmatpush.bf16.msra.mxu0 %v736
        %756 = vmatpush.bf16.msra.mxu0 %v735
        %757 = vmatpush.bf16.msra.mxu0 %v734
        %758 = vmatmul.bf16.gmra.mxu0 %v681
        %v759 = vpop.f32.mrf.mxu0
        %v760 = vadd.f32 0.0, %v759
        %v761 = vpop.f32.mrf.mxu0
        %v762 = vadd.f32 0.0, %v761
        %763 = vmatmul.bf16.gmra.mxu0 %v682
        %v764 = vpop.f32.mrf.mxu0
        %v765 = vadd.f32 0.0, %v764
        %v766 = vpop.f32.mrf.mxu0
        %v767 = vadd.f32 0.0, %v766
        %768 = vmatmul.bf16.gmra.mxu0 %v683
        %v769 = vpop.f32.mrf.mxu0
        %v770 = vadd.f32 0.0, %v769
        %v771 = vpop.f32.mrf.mxu0
        %v772 = vadd.f32 0.0, %v771
        %773 = vmatmul.bf16.gmra.mxu0 %v684
        %v774 = vpop.f32.mrf.mxu0
        %v775 = vadd.f32 0.0, %v774
        %v776 = vpop.f32.mrf.mxu0
        %v777 = vadd.f32 0.0, %v776
        %778 = vdwg.mxu0
        %v779 = vadd.f32 %v654, %v760
        %v780 = vadd.f32 %v656, %v762
        %v781 = vadd.f32 %v659, %v765
        %v782 = vadd.f32 %v661, %v767
        %v783 = vadd.f32 %v664, %v770
        %v784 = vadd.f32 %v666, %v772
        %v785 = vadd.f32 %v669, %v775
        %v786 = vadd.f32 %v671, %v777
        %v787 = vld [vmem:[%s453] sm:$0xff]
        %v788 = vld [vmem:[%s453 + $0x10] sm:$0xff]
        %v789 = vld [vmem:[%s453 + $0x20] sm:$0xff]
        %v790 = vld [vmem:[%s453 + $0x30] sm:$0xff]
        %v791 = vld [vmem:[%s453 + $0x40] sm:$0xff]
        %v792 = vld [vmem:[%s453 + $0x50] sm:$0xff]
        %v793 = vld [vmem:[%s453 + $0x60] sm:$0xff]
        %v794 = vld [vmem:[%s453 + $0x70] sm:$0xff]
        %v795 = vpack.c.bf16 %v788, %v787
        %v796 = vpack.c.bf16 %v790, %v789
        %v797 = vpack.c.bf16 %v792, %v791
        %v798 = vpack.c.bf16 %v794, %v793
        %s799 = scalar_lea.vmem [#allocation3], 192
        %v800 = vld [vmem:[%s799] sm:$0xf]
        %v801 = vld [vmem:[%s799 + $0x4] sm:$0xf]
        %v802 = vld [vmem:[%s799 + $0x8] sm:$0xf]
        %v803 = vld [vmem:[%s799 + $0xc] sm:$0xf]
        %v804 = vld [vmem:[%s799 + $0x10] sm:$0xf]
        %v805 = vld [vmem:[%s799 + $0x14] sm:$0xf]
        %v806 = vld [vmem:[%s799 + $0x18] sm:$0xf]
        %v807 = vld [vmem:[%s799 + $0x1c] sm:$0xf]
        %v808 = vld [vmem:[%s799 + $0x20] sm:$0xf]
        %v809 = vld [vmem:[%s799 + $0x24] sm:$0xf]
        %v810 = vld [vmem:[%s799 + $0x28] sm:$0xf]
        %v811 = vld [vmem:[%s799 + $0x2c] sm:$0xf]
        %v812 = vld [vmem:[%s799 + $0x30] sm:$0xf]
        %v813 = vld [vmem:[%s799 + $0x34] sm:$0xf]
        %v814 = vld [vmem:[%s799 + $0x38] sm:$0xf]
        %v815 = vld [vmem:[%s799 + $0x3c] sm:$0xf]
        %v832 = vunpack.c.l.b16 %v800
        %v833 = vunpack.c.l.b16 %v801
        %v834 = vunpack.c.l.b16 %v802
        %v835 = vunpack.c.l.b16 %v803
        %v836 = vunpack.c.l.b16 %v804
        %v837 = vunpack.c.l.b16 %v805
        %v838 = vunpack.c.l.b16 %v806
        %v839 = vunpack.c.l.b16 %v807
        %v840 = vunpack.c.l.b16 %v808
        %v841 = vunpack.c.l.b16 %v809
        %v842 = vunpack.c.l.b16 %v810
        %v843 = vunpack.c.l.b16 %v811
        %v844 = vunpack.c.l.b16 %v812
        %v845 = vunpack.c.l.b16 %v813
        %v846 = vunpack.c.l.b16 %v814
        %v847 = vunpack.c.l.b16 %v815
        %v848 = vpack.c.b16 %v833, %v832
        %v849 = vpack.c.b16 %v835, %v834
        %v850 = vpack.c.b16 %v837, %v836
        %v851 = vpack.c.b16 %v839, %v838
        %v852 = vpack.c.b16 %v841, %v840
        %v853 = vpack.c.b16 %v843, %v842
        %v854 = vpack.c.b16 %v845, %v844
        %v855 = vpack.c.b16 %v847, %v846
        %864 = vmatpush.bf16.msra.mxu0 %v855
        %865 = vmatpush.bf16.msra.mxu0 %v854
        %866 = vmatpush.bf16.msra.mxu0 %v853
        %867 = vmatpush.bf16.msra.mxu0 %v852
        %868 = vmatpush.bf16.msra.mxu0 %v851
        %869 = vmatpush.bf16.msra.mxu0 %v850
        %870 = vmatpush.bf16.msra.mxu0 %v849
        %871 = vmatpush.bf16.msra.mxu0 %v848
        %872 = vmatmul.bf16.gmra.mxu0 %v795
        %v873 = vpop.f32.mrf.mxu0
        %v874 = vadd.f32 0.0, %v873
        %v875 = vpop.f32.mrf.mxu0
        %v876 = vadd.f32 0.0, %v875
        %877 = vmatmul.bf16.gmra.mxu0 %v796
        %v878 = vpop.f32.mrf.mxu0
        %v879 = vadd.f32 0.0, %v878
        %v880 = vpop.f32.mrf.mxu0
        %v881 = vadd.f32 0.0, %v880
        %882 = vmatmul.bf16.gmra.mxu0 %v797
        %v883 = vpop.f32.mrf.mxu0
        %v884 = vadd.f32 0.0, %v883
        %v885 = vpop.f32.mrf.mxu0
        %v886 = vadd.f32 0.0, %v885
        %887 = vmatmul.bf16.gmra.mxu0 %v798
        %v888 = vpop.f32.mrf.mxu0
        %v889 = vadd.f32 0.0, %v888
        %v890 = vpop.f32.mrf.mxu0
        %v891 = vadd.f32 0.0, %v890
        %892 = vdwg.mxu0
        %v893 = vadd.f32 %v779, %v874
        %v894 = vadd.f32 %v780, %v876
        %v895 = vadd.f32 %v781, %v879
        %v896 = vadd.f32 %v782, %v881
        %v897 = vadd.f32 %v783, %v884
        %v898 = vadd.f32 %v784, %v886
        %v899 = vadd.f32 %v785, %v889
        %v900 = vadd.f32 %v786, %v891
        %v901 = vld [vmem:[%s453 + $0x1] sm:$0xff]
        %v902 = vld [vmem:[%s453 + $0x11] sm:$0xff]
        %v903 = vld [vmem:[%s453 + $0x21] sm:$0xff]
        %v904 = vld [vmem:[%s453 + $0x31] sm:$0xff]
        %v905 = vld [vmem:[%s453 + $0x41] sm:$0xff]
        %v906 = vld [vmem:[%s453 + $0x51] sm:$0xff]
        %v907 = vld [vmem:[%s453 + $0x61] sm:$0xff]
        %v908 = vld [vmem:[%s453 + $0x71] sm:$0xff]
        %v909 = vpack.c.bf16 %v902, %v901
        %v910 = vpack.c.bf16 %v904, %v903
        %v911 = vpack.c.bf16 %v906, %v905
        %v912 = vpack.c.bf16 %v908, %v907
        %s913 = scalar_lea.vmem [#allocation3], 256
        %v914 = vld [vmem:[%s913] sm:$0xf]
        %v915 = vld [vmem:[%s913 + $0x4] sm:$0xf]
        %v916 = vld [vmem:[%s913 + $0x8] sm:$0xf]
        %v917 = vld [vmem:[%s913 + $0xc] sm:$0xf]
        %v918 = vld [vmem:[%s913 + $0x10] sm:$0xf]
        %v919 = vld [vmem:[%s913 + $0x14] sm:$0xf]
        %v920 = vld [vmem:[%s913 + $0x18] sm:$0xf]
        %v921 = vld [vmem:[%s913 + $0x1c] sm:$0xf]
        %v922 = vld [vmem:[%s913 + $0x20] sm:$0xf]
        %v923 = vld [vmem:[%s913 + $0x24] sm:$0xf]
        %v924 = vld [vmem:[%s913 + $0x28] sm:$0xf]
        %v925 = vld [vmem:[%s913 + $0x2c] sm:$0xf]
        %v926 = vld [vmem:[%s913 + $0x30] sm:$0xf]
        %v927 = vld [vmem:[%s913 + $0x34] sm:$0xf]
        %v928 = vld [vmem:[%s913 + $0x38] sm:$0xf]
        %v929 = vld [vmem:[%s913 + $0x3c] sm:$0xf]
        %v946 = vunpack.c.l.b16 %v914
        %v947 = vunpack.c.l.b16 %v915
        %v948 = vunpack.c.l.b16 %v916
        %v949 = vunpack.c.l.b16 %v917
        %v950 = vunpack.c.l.b16 %v918
        %v951 = vunpack.c.l.b16 %v919
        %v952 = vunpack.c.l.b16 %v920
        %v953 = vunpack.c.l.b16 %v921
        %v954 = vunpack.c.l.b16 %v922
        %v955 = vunpack.c.l.b16 %v923
        %v956 = vunpack.c.l.b16 %v924
        %v957 = vunpack.c.l.b16 %v925
        %v958 = vunpack.c.l.b16 %v926
        %v959 = vunpack.c.l.b16 %v927
        %v960 = vunpack.c.l.b16 %v928
        %v961 = vunpack.c.l.b16 %v929
        %v962 = vpack.c.b16 %v947, %v946
        %v963 = vpack.c.b16 %v949, %v948
        %v964 = vpack.c.b16 %v951, %v950
        %v965 = vpack.c.b16 %v953, %v952
        %v966 = vpack.c.b16 %v955, %v954
        %v967 = vpack.c.b16 %v957, %v956
        %v968 = vpack.c.b16 %v959, %v958
        %v969 = vpack.c.b16 %v961, %v960
        %978 = vmatpush.bf16.msra.mxu0 %v969
        %979 = vmatpush.bf16.msra.mxu0 %v968
        %980 = vmatpush.bf16.msra.mxu0 %v967
        %981 = vmatpush.bf16.msra.mxu0 %v966
        %982 = vmatpush.bf16.msra.mxu0 %v965
        %983 = vmatpush.bf16.msra.mxu0 %v964
        %984 = vmatpush.bf16.msra.mxu0 %v963
        %985 = vmatpush.bf16.msra.mxu0 %v962
        %986 = vmatmul.bf16.gmra.mxu0 %v909
        %v987 = vpop.f32.mrf.mxu0
        %v988 = vadd.f32 0.0, %v987
        %v989 = vpop.f32.mrf.mxu0
        %v990 = vadd.f32 0.0, %v989
        %991 = vmatmul.bf16.gmra.mxu0 %v910
        %v992 = vpop.f32.mrf.mxu0
        %v993 = vadd.f32 0.0, %v992
        %v994 = vpop.f32.mrf.mxu0
        %v995 = vadd.f32 0.0, %v994
        %996 = vmatmul.bf16.gmra.mxu0 %v911
        %v997 = vpop.f32.mrf.mxu0
        %v998 = vadd.f32 0.0, %v997
        %v999 = vpop.f32.mrf.mxu0
        %v1000 = vadd.f32 0.0, %v999
        %1001 = vmatmul.bf16.gmra.mxu0 %v912
        %v1002 = vpop.f32.mrf.mxu0
        %v1003 = vadd.f32 0.0, %v1002
        %v1004 = vpop.f32.mrf.mxu0
        %v1005 = vadd.f32 0.0, %v1004
        %1006 = vdwg.mxu0
        %v1007 = vadd.f32 %v893, %v988
        %v1008 = vadd.f32 %v894, %v990
        %v1009 = vadd.f32 %v895, %v993
        %v1010 = vadd.f32 %v896, %v995
        %v1011 = vadd.f32 %v897, %v998
        %v1012 = vadd.f32 %v898, %v1000
        %v1013 = vadd.f32 %v899, %v1003
        %v1014 = vadd.f32 %v900, %v1005
        %v1015 = vld [vmem:[%s453 + $0x2] sm:$0xff]
        %v1016 = vld [vmem:[%s453 + $0x12] sm:$0xff]
        %v1017 = vld [vmem:[%s453 + $0x22] sm:$0xff]
        %v1018 = vld [vmem:[%s453 + $0x32] sm:$0xff]
        %v1019 = vld [vmem:[%s453 + $0x42] sm:$0xff]
        %v1020 = vld [vmem:[%s453 + $0x52] sm:$0xff]
        %v1021 = vld [vmem:[%s453 + $0x62] sm:$0xff]
        %v1022 = vld [vmem:[%s453 + $0x72] sm:$0xff]
        %v1023 = vpack.c.bf16 %v1016, %v1015
        %v1024 = vpack.c.bf16 %v1018, %v1017
        %v1025 = vpack.c.bf16 %v1020, %v1019
        %v1026 = vpack.c.bf16 %v1022, %v1021
        %s1027 = scalar_lea.vmem [#allocation3], 320
        %v1028 = vld [vmem:[%s1027] sm:$0xf]
        %v1029 = vld [vmem:[%s1027 + $0x4] sm:$0xf]
        %v1030 = vld [vmem:[%s1027 + $0x8] sm:$0xf]
        %v1031 = vld [vmem:[%s1027 + $0xc] sm:$0xf]
        %v1032 = vld [vmem:[%s1027 + $0x10] sm:$0xf]
        %v1033 = vld [vmem:[%s1027 + $0x14] sm:$0xf]
        %v1034 = vld [vmem:[%s1027 + $0x18] sm:$0xf]
        %v1035 = vld [vmem:[%s1027 + $0x1c] sm:$0xf]
        %v1036 = vld [vmem:[%s1027 + $0x20] sm:$0xf]
        %v1037 = vld [vmem:[%s1027 + $0x24] sm:$0xf]
        %v1038 = vld [vmem:[%s1027 + $0x28] sm:$0xf]
        %v1039 = vld [vmem:[%s1027 + $0x2c] sm:$0xf]
        %v1040 = vld [vmem:[%s1027 + $0x30] sm:$0xf]
        %v1041 = vld [vmem:[%s1027 + $0x34] sm:$0xf]
        %v1042 = vld [vmem:[%s1027 + $0x38] sm:$0xf]
        %v1043 = vld [vmem:[%s1027 + $0x3c] sm:$0xf]
        %v1060 = vunpack.c.l.b16 %v1028
        %v1061 = vunpack.c.l.b16 %v1029
        %v1062 = vunpack.c.l.b16 %v1030
        %v1063 = vunpack.c.l.b16 %v1031
        %v1064 = vunpack.c.l.b16 %v1032
        %v1065 = vunpack.c.l.b16 %v1033
        %v1066 = vunpack.c.l.b16 %v1034
        %v1067 = vunpack.c.l.b16 %v1035
        %v1068 = vunpack.c.l.b16 %v1036
        %v1069 = vunpack.c.l.b16 %v1037
        %v1070 = vunpack.c.l.b16 %v1038
        %v1071 = vunpack.c.l.b16 %v1039
        %v1072 = vunpack.c.l.b16 %v1040
        %v1073 = vunpack.c.l.b16 %v1041
        %v1074 = vunpack.c.l.b16 %v1042
        %v1075 = vunpack.c.l.b16 %v1043
        %v1076 = vpack.c.b16 %v1061, %v1060
        %v1077 = vpack.c.b16 %v1063, %v1062
        %v1078 = vpack.c.b16 %v1065, %v1064
        %v1079 = vpack.c.b16 %v1067, %v1066
        %v1080 = vpack.c.b16 %v1069, %v1068
        %v1081 = vpack.c.b16 %v1071, %v1070
        %v1082 = vpack.c.b16 %v1073, %v1072
        %v1083 = vpack.c.b16 %v1075, %v1074
        %1092 = vmatpush.bf16.msra.mxu0 %v1083
        %1093 = vmatpush.bf16.msra.mxu0 %v1082
        %1094 = vmatpush.bf16.msra.mxu0 %v1081
        %1095 = vmatpush.bf16.msra.mxu0 %v1080
        %1096 = vmatpush.bf16.msra.mxu0 %v1079
        %1097 = vmatpush.bf16.msra.mxu0 %v1078
        %1098 = vmatpush.bf16.msra.mxu0 %v1077
        %1099 = vmatpush.bf16.msra.mxu0 %v1076
        %1100 = vmatmul.bf16.gmra.mxu0 %v1023
        %v1101 = vpop.f32.mrf.mxu0
        %v1102 = vadd.f32 0.0, %v1101
        %v1103 = vpop.f32.mrf.mxu0
        %v1104 = vadd.f32 0.0, %v1103
        %1105 = vmatmul.bf16.gmra.mxu0 %v1024
        %v1106 = vpop.f32.mrf.mxu0
        %v1107 = vadd.f32 0.0, %v1106
        %v1108 = vpop.f32.mrf.mxu0
        %v1109 = vadd.f32 0.0, %v1108
        %1110 = vmatmul.bf16.gmra.mxu0 %v1025
        %v1111 = vpop.f32.mrf.mxu0
        %v1112 = vadd.f32 0.0, %v1111
        %v1113 = vpop.f32.mrf.mxu0
        %v1114 = vadd.f32 0.0, %v1113
        %1115 = vmatmul.bf16.gmra.mxu0 %v1026
        %v1116 = vpop.f32.mrf.mxu0
        %v1117 = vadd.f32 0.0, %v1116
        %v1118 = vpop.f32.mrf.mxu0
        %v1119 = vadd.f32 0.0, %v1118
        %1120 = vdwg.mxu0
        %v1121 = vadd.f32 %v1007, %v1102
        %v1122 = vadd.f32 %v1008, %v1104
        %v1123 = vadd.f32 %v1009, %v1107
        %v1124 = vadd.f32 %v1010, %v1109
        %v1125 = vadd.f32 %v1011, %v1112
        %v1126 = vadd.f32 %v1012, %v1114
        %v1127 = vadd.f32 %v1013, %v1117
        %v1128 = vadd.f32 %v1014, %v1119
        %s1129 = scalar_lea.vmem [#allocation2], 32
        %v1130 = vld [vmem:[%s1129] sm:$0xff]
        %v1131 = vld [vmem:[%s1129 + $0x10] sm:$0xff]
        %v1132 = vld [vmem:[%s1129 + $0x20] sm:$0xff]
        %v1133 = vld [vmem:[%s1129 + $0x30] sm:$0xff]
        %v1134 = vld [vmem:[%s1129 + $0x40] sm:$0xff]
        %v1135 = vld [vmem:[%s1129 + $0x50] sm:$0xff]
        %v1136 = vld [vmem:[%s1129 + $0x60] sm:$0xff]
        %v1137 = vld [vmem:[%s1129 + $0x70] sm:$0xff]
        %v1138 = vpack.c.bf16 %v1131, %v1130
        %v1139 = vpack.c.bf16 %v1133, %v1132
        %v1140 = vpack.c.bf16 %v1135, %v1134
        %v1141 = vpack.c.bf16 %v1137, %v1136
        %s1142 = scalar_lea.vmem [#allocation3], 384
        %v1143 = vld [vmem:[%s1142] sm:$0xf]
        %v1144 = vld [vmem:[%s1142 + $0x4] sm:$0xf]
        %v1145 = vld [vmem:[%s1142 + $0x8] sm:$0xf]
        %v1146 = vld [vmem:[%s1142 + $0xc] sm:$0xf]
        %v1147 = vld [vmem:[%s1142 + $0x10] sm:$0xf]
        %v1148 = vld [vmem:[%s1142 + $0x14] sm:$0xf]
        %v1149 = vld [vmem:[%s1142 + $0x18] sm:$0xf]
        %v1150 = vld [vmem:[%s1142 + $0x1c] sm:$0xf]
        %v1151 = vld [vmem:[%s1142 + $0x20] sm:$0xf]
        %v1152 = vld [vmem:[%s1142 + $0x24] sm:$0xf]
        %v1153 = vld [vmem:[%s1142 + $0x28] sm:$0xf]
        %v1154 = vld [vmem:[%s1142 + $0x2c] sm:$0xf]
        %v1155 = vld [vmem:[%s1142 + $0x30] sm:$0xf]
        %v1156 = vld [vmem:[%s1142 + $0x34] sm:$0xf]
        %v1157 = vld [vmem:[%s1142 + $0x38] sm:$0xf]
        %v1158 = vld [vmem:[%s1142 + $0x3c] sm:$0xf]
        %v1175 = vunpack.c.l.b16 %v1143
        %v1176 = vunpack.c.l.b16 %v1144
        %v1177 = vunpack.c.l.b16 %v1145
        %v1178 = vunpack.c.l.b16 %v1146
        %v1179 = vunpack.c.l.b16 %v1147
        %v1180 = vunpack.c.l.b16 %v1148
        %v1181 = vunpack.c.l.b16 %v1149
        %v1182 = vunpack.c.l.b16 %v1150
        %v1183 = vunpack.c.l.b16 %v1151
        %v1184 = vunpack.c.l.b16 %v1152
        %v1185 = vunpack.c.l.b16 %v1153
        %v1186 = vunpack.c.l.b16 %v1154
        %v1187 = vunpack.c.l.b16 %v1155
        %v1188 = vunpack.c.l.b16 %v1156
        %v1189 = vunpack.c.l.b16 %v1157
        %v1190 = vunpack.c.l.b16 %v1158
        %v1191 = vpack.c.b16 %v1176, %v1175
        %v1192 = vpack.c.b16 %v1178, %v1177
        %v1193 = vpack.c.b16 %v1180, %v1179
        %v1194 = vpack.c.b16 %v1182, %v1181
        %v1195 = vpack.c.b16 %v1184, %v1183
        %v1196 = vpack.c.b16 %v1186, %v1185
        %v1197 = vpack.c.b16 %v1188, %v1187
        %v1198 = vpack.c.b16 %v1190, %v1189
        %1207 = vmatpush.bf16.msra.mxu0 %v1198
        %1208 = vmatpush.bf16.msra.mxu0 %v1197
        %1209 = vmatpush.bf16.msra.mxu0 %v1196
        %1210 = vmatpush.bf16.msra.mxu0 %v1195
        %1211 = vmatpush.bf16.msra.mxu0 %v1194
        %1212 = vmatpush.bf16.msra.mxu0 %v1193
        %1213 = vmatpush.bf16.msra.mxu0 %v1192
        %1214 = vmatpush.bf16.msra.mxu0 %v1191
        %1215 = vmatmul.bf16.gmra.mxu0 %v1138
        %v1216 = vpop.f32.mrf.mxu0
        %v1217 = vadd.f32 0.0, %v1216
        %v1218 = vpop.f32.mrf.mxu0
        %v1219 = vadd.f32 0.0, %v1218
        %1220 = vmatmul.bf16.gmra.mxu0 %v1139
        %v1221 = vpop.f32.mrf.mxu0
        %v1222 = vadd.f32 0.0, %v1221
        %v1223 = vpop.f32.mrf.mxu0
        %v1224 = vadd.f32 0.0, %v1223
        %1225 = vmatmul.bf16.gmra.mxu0 %v1140
        %v1226 = vpop.f32.mrf.mxu0
        %v1227 = vadd.f32 0.0, %v1226
        %v1228 = vpop.f32.mrf.mxu0
        %v1229 = vadd.f32 0.0, %v1228
        %1230 = vmatmul.bf16.gmra.mxu0 %v1141
        %v1231 = vpop.f32.mrf.mxu0
        %v1232 = vadd.f32 0.0, %v1231
        %v1233 = vpop.f32.mrf.mxu0
        %v1234 = vadd.f32 0.0, %v1233
        %1235 = vdwg.mxu0
        %v1236 = vadd.f32 %v1121, %v1217
        %v1237 = vadd.f32 %v1122, %v1219
        %v1238 = vadd.f32 %v1123, %v1222
        %v1239 = vadd.f32 %v1124, %v1224
        %v1240 = vadd.f32 %v1125, %v1227
        %v1241 = vadd.f32 %v1126, %v1229
        %v1242 = vadd.f32 %v1127, %v1232
        %v1243 = vadd.f32 %v1128, %v1234
        %v1244 = vld [vmem:[%s1129 + $0x1] sm:$0xff]
        %v1245 = vld [vmem:[%s1129 + $0x11] sm:$0xff]
        %v1246 = vld [vmem:[%s1129 + $0x21] sm:$0xff]
        %v1247 = vld [vmem:[%s1129 + $0x31] sm:$0xff]
        %v1248 = vld [vmem:[%s1129 + $0x41] sm:$0xff]
        %v1249 = vld [vmem:[%s1129 + $0x51] sm:$0xff]
        %v1250 = vld [vmem:[%s1129 + $0x61] sm:$0xff]
        %v1251 = vld [vmem:[%s1129 + $0x71] sm:$0xff]
        %v1252 = vpack.c.bf16 %v1245, %v1244
        %v1253 = vpack.c.bf16 %v1247, %v1246
        %v1254 = vpack.c.bf16 %v1249, %v1248
        %v1255 = vpack.c.bf16 %v1251, %v1250
        %s1256 = scalar_lea.vmem [#allocation3], 448
        %v1257 = vld [vmem:[%s1256] sm:$0xf]
        %v1258 = vld [vmem:[%s1256 + $0x4] sm:$0xf]
        %v1259 = vld [vmem:[%s1256 + $0x8] sm:$0xf]
        %v1260 = vld [vmem:[%s1256 + $0xc] sm:$0xf]
        %v1261 = vld [vmem:[%s1256 + $0x10] sm:$0xf]
        %v1262 = vld [vmem:[%s1256 + $0x14] sm:$0xf]
        %v1263 = vld [vmem:[%s1256 + $0x18] sm:$0xf]
        %v1264 = vld [vmem:[%s1256 + $0x1c] sm:$0xf]
        %v1265 = vld [vmem:[%s1256 + $0x20] sm:$0xf]
        %v1266 = vld [vmem:[%s1256 + $0x24] sm:$0xf]
        %v1267 = vld [vmem:[%s1256 + $0x28] sm:$0xf]
        %v1268 = vld [vmem:[%s1256 + $0x2c] sm:$0xf]
        %v1269 = vld [vmem:[%s1256 + $0x30] sm:$0xf]
        %v1270 = vld [vmem:[%s1256 + $0x34] sm:$0xf]
        %v1271 = vld [vmem:[%s1256 + $0x38] sm:$0xf]
        %v1272 = vld [vmem:[%s1256 + $0x3c] sm:$0xf]
        %v1289 = vunpack.c.l.b16 %v1257
        %v1290 = vunpack.c.l.b16 %v1258
        %v1291 = vunpack.c.l.b16 %v1259
        %v1292 = vunpack.c.l.b16 %v1260
        %v1293 = vunpack.c.l.b16 %v1261
        %v1294 = vunpack.c.l.b16 %v1262
        %v1295 = vunpack.c.l.b16 %v1263
        %v1296 = vunpack.c.l.b16 %v1264
        %v1297 = vunpack.c.l.b16 %v1265
        %v1298 = vunpack.c.l.b16 %v1266
        %v1299 = vunpack.c.l.b16 %v1267
        %v1300 = vunpack.c.l.b16 %v1268
        %v1301 = vunpack.c.l.b16 %v1269
        %v1302 = vunpack.c.l.b16 %v1270
        %v1303 = vunpack.c.l.b16 %v1271
        %v1304 = vunpack.c.l.b16 %v1272
        %v1305 = vpack.c.b16 %v1290, %v1289
        %v1306 = vpack.c.b16 %v1292, %v1291
        %v1307 = vpack.c.b16 %v1294, %v1293
        %v1308 = vpack.c.b16 %v1296, %v1295
        %v1309 = vpack.c.b16 %v1298, %v1297
        %v1310 = vpack.c.b16 %v1300, %v1299
        %v1311 = vpack.c.b16 %v1302, %v1301
        %v1312 = vpack.c.b16 %v1304, %v1303
        %1321 = vmatpush.bf16.msra.mxu0 %v1312
        %1322 = vmatpush.bf16.msra.mxu0 %v1311
        %1323 = vmatpush.bf16.msra.mxu0 %v1310
        %1324 = vmatpush.bf16.msra.mxu0 %v1309
        %1325 = vmatpush.bf16.msra.mxu0 %v1308
        %1326 = vmatpush.bf16.msra.mxu0 %v1307
        %1327 = vmatpush.bf16.msra.mxu0 %v1306
        %1328 = vmatpush.bf16.msra.mxu0 %v1305
        %1329 = vmatmul.bf16.gmra.mxu0 %v1252
        %v1330 = vpop.f32.mrf.mxu0
        %v1331 = vadd.f32 0.0, %v1330
        %v1332 = vpop.f32.mrf.mxu0
        %v1333 = vadd.f32 0.0, %v1332
        %1334 = vmatmul.bf16.gmra.mxu0 %v1253
        %v1335 = vpop.f32.mrf.mxu0
        %v1336 = vadd.f32 0.0, %v1335
        %v1337 = vpop.f32.mrf.mxu0
        %v1338 = vadd.f32 0.0, %v1337
        %1339 = vmatmul.bf16.gmra.mxu0 %v1254
        %v1340 = vpop.f32.mrf.mxu0
        %v1341 = vadd.f32 0.0, %v1340
        %v1342 = vpop.f32.mrf.mxu0
        %v1343 = vadd.f32 0.0, %v1342
        %1344 = vmatmul.bf16.gmra.mxu0 %v1255
        %v1345 = vpop.f32.mrf.mxu0
        %v1346 = vadd.f32 0.0, %v1345
        %v1347 = vpop.f32.mrf.mxu0
        %v1348 = vadd.f32 0.0, %v1347
        %1349 = vdwg.mxu0
        %v1350 = vadd.f32 %v1236, %v1331
        %v1351 = vadd.f32 %v1237, %v1333
        %v1352 = vadd.f32 %v1238, %v1336
        %v1353 = vadd.f32 %v1239, %v1338
        %v1354 = vadd.f32 %v1240, %v1341
        %v1355 = vadd.f32 %v1241, %v1343
        %v1356 = vadd.f32 %v1242, %v1346
        %v1357 = vadd.f32 %v1243, %v1348
        %v1358 = vld [vmem:[%s1129 + $0x2] sm:$0xff]
        %v1359 = vld [vmem:[%s1129 + $0x12] sm:$0xff]
        %v1360 = vld [vmem:[%s1129 + $0x22] sm:$0xff]
        %v1361 = vld [vmem:[%s1129 + $0x32] sm:$0xff]
        %v1362 = vld [vmem:[%s1129 + $0x42] sm:$0xff]
        %v1363 = vld [vmem:[%s1129 + $0x52] sm:$0xff]
        %v1364 = vld [vmem:[%s1129 + $0x62] sm:$0xff]
        %v1365 = vld [vmem:[%s1129 + $0x72] sm:$0xff]
        %v1366 = vpack.c.bf16 %v1359, %v1358
        %v1367 = vpack.c.bf16 %v1361, %v1360
        %v1368 = vpack.c.bf16 %v1363, %v1362
        %v1369 = vpack.c.bf16 %v1365, %v1364
        %s1370 = scalar_lea.vmem [#allocation3], 512
        %v1371 = vld [vmem:[%s1370] sm:$0xf]
        %v1372 = vld [vmem:[%s1370 + $0x4] sm:$0xf]
        %v1373 = vld [vmem:[%s1370 + $0x8] sm:$0xf]
        %v1374 = vld [vmem:[%s1370 + $0xc] sm:$0xf]
        %v1375 = vld [vmem:[%s1370 + $0x10] sm:$0xf]
        %v1376 = vld [vmem:[%s1370 + $0x14] sm:$0xf]
        %v1377 = vld [vmem:[%s1370 + $0x18] sm:$0xf]
        %v1378 = vld [vmem:[%s1370 + $0x1c] sm:$0xf]
        %v1379 = vld [vmem:[%s1370 + $0x20] sm:$0xf]
        %v1380 = vld [vmem:[%s1370 + $0x24] sm:$0xf]
        %v1381 = vld [vmem:[%s1370 + $0x28] sm:$0xf]
        %v1382 = vld [vmem:[%s1370 + $0x2c] sm:$0xf]
        %v1383 = vld [vmem:[%s1370 + $0x30] sm:$0xf]
        %v1384 = vld [vmem:[%s1370 + $0x34] sm:$0xf]
        %v1385 = vld [vmem:[%s1370 + $0x38] sm:$0xf]
        %v1386 = vld [vmem:[%s1370 + $0x3c] sm:$0xf]
        %v1403 = vunpack.c.l.b16 %v1371
        %v1404 = vunpack.c.l.b16 %v1372
        %v1405 = vunpack.c.l.b16 %v1373
        %v1406 = vunpack.c.l.b16 %v1374
        %v1407 = vunpack.c.l.b16 %v1375
        %v1408 = vunpack.c.l.b16 %v1376
        %v1409 = vunpack.c.l.b16 %v1377
        %v1410 = vunpack.c.l.b16 %v1378
        %v1411 = vunpack.c.l.b16 %v1379
        %v1412 = vunpack.c.l.b16 %v1380
        %v1413 = vunpack.c.l.b16 %v1381
        %v1414 = vunpack.c.l.b16 %v1382
        %v1415 = vunpack.c.l.b16 %v1383
        %v1416 = vunpack.c.l.b16 %v1384
        %v1417 = vunpack.c.l.b16 %v1385
        %v1418 = vunpack.c.l.b16 %v1386
        %v1419 = vpack.c.b16 %v1404, %v1403
        %v1420 = vpack.c.b16 %v1406, %v1405
        %v1421 = vpack.c.b16 %v1408, %v1407
        %v1422 = vpack.c.b16 %v1410, %v1409
        %v1423 = vpack.c.b16 %v1412, %v1411
        %v1424 = vpack.c.b16 %v1414, %v1413
        %v1425 = vpack.c.b16 %v1416, %v1415
        %v1426 = vpack.c.b16 %v1418, %v1417
        %1435 = vmatpush.bf16.msra.mxu0 %v1426
        %1436 = vmatpush.bf16.msra.mxu0 %v1425
        %1437 = vmatpush.bf16.msra.mxu0 %v1424
        %1438 = vmatpush.bf16.msra.mxu0 %v1423
        %1439 = vmatpush.bf16.msra.mxu0 %v1422
        %1440 = vmatpush.bf16.msra.mxu0 %v1421
        %1441 = vmatpush.bf16.msra.mxu0 %v1420
        %1442 = vmatpush.bf16.msra.mxu0 %v1419
        %1443 = vmatmul.bf16.gmra.mxu0 %v1366
        %v1444 = vpop.f32.mrf.mxu0
        %v1445 = vadd.f32 0.0, %v1444
        %v1446 = vpop.f32.mrf.mxu0
        %v1447 = vadd.f32 0.0, %v1446
        %1448 = vmatmul.bf16.gmra.mxu0 %v1367
        %v1449 = vpop.f32.mrf.mxu0
        %v1450 = vadd.f32 0.0, %v1449
        %v1451 = vpop.f32.mrf.mxu0
        %v1452 = vadd.f32 0.0, %v1451
        %1453 = vmatmul.bf16.gmra.mxu0 %v1368
        %v1454 = vpop.f32.mrf.mxu0
        %v1455 = vadd.f32 0.0, %v1454
        %v1456 = vpop.f32.mrf.mxu0
        %v1457 = vadd.f32 0.0, %v1456
        %1458 = vmatmul.bf16.gmra.mxu0 %v1369
        %v1459 = vpop.f32.mrf.mxu0
        %v1460 = vadd.f32 0.0, %v1459
        %v1461 = vpop.f32.mrf.mxu0
        %v1462 = vadd.f32 0.0, %v1461
        %1463 = vdwg.mxu0
        %v1464 = vadd.f32 %v1350, %v1445
        %v1465 = vadd.f32 %v1351, %v1447
        %v1466 = vadd.f32 %v1352, %v1450
        %v1467 = vadd.f32 %v1353, %v1452
        %v1468 = vadd.f32 %v1354, %v1455
        %v1469 = vadd.f32 %v1355, %v1457
        %v1470 = vadd.f32 %v1356, %v1460
        %v1471 = vadd.f32 %v1357, %v1462
        %v1472 = vld [vmem:[%s4] sm:$0x1]
        %v1474 = vperm.slane %v1472, 0
        %v1476 = vadd.f32 %v1464, %v1474
        %v1477 = vadd.f32 %v1465, %v1474
        %v1478 = vadd.f32 %v1466, %v1474
        %v1479 = vadd.f32 %v1467, %v1474
        %v1480 = vadd.f32 %v1468, %v1474
        %v1481 = vadd.f32 %v1469, %v1474
        %v1482 = vadd.f32 %v1470, %v1474
        %v1483 = vadd.f32 %v1471, %v1474
        %v1484 = vmax.f32 %v1476, 0.0
        %v1485 = vmax.f32 %v1477, 0.0
        %v1486 = vmax.f32 %v1478, 0.0
        %v1487 = vmax.f32 %v1479, 0.0
        %v1488 = vmax.f32 %v1480, 0.0
        %v1489 = vmax.f32 %v1481, 0.0
        %v1490 = vmax.f32 %v1482, 0.0
        %v1491 = vmax.f32 %v1483, 0.0
        %v1492 = vpack.c.bf16 %v1485, %v1484
        %v1493 = vpack.c.bf16 %v1487, %v1486
        %v1494 = vpack.c.bf16 %v1489, %v1488
        %v1495 = vpack.c.bf16 %v1491, %v1490
        %v1496 = vld [vmem:[%s5] sm:$0xf]
        %v1497 = vld [vmem:[%s5 + $0x4] sm:$0xf]
        %v1498 = vld [vmem:[%s5 + $0x8] sm:$0xf]
        %v1499 = vld [vmem:[%s5 + $0xc] sm:$0xf]
        %v1500 = vld [vmem:[%s5 + $0x10] sm:$0xf]
        %v1501 = vld [vmem:[%s5 + $0x14] sm:$0xf]
        %v1502 = vld [vmem:[%s5 + $0x18] sm:$0xf]
        %v1503 = vld [vmem:[%s5 + $0x1c] sm:$0xf]
        %v1504 = vld [vmem:[%s5 + $0x20] sm:$0xf]
        %v1505 = vld [vmem:[%s5 + $0x24] sm:$0xf]
        %v1506 = vld [vmem:[%s5 + $0x28] sm:$0xf]
        %v1507 = vld [vmem:[%s5 + $0x2c] sm:$0xf]
        %v1508 = vld [vmem:[%s5 + $0x30] sm:$0xf]
        %v1509 = vld [vmem:[%s5 + $0x34] sm:$0xf]
        %v1510 = vld [vmem:[%s5 + $0x38] sm:$0xf]
        %v1511 = vld [vmem:[%s5 + $0x3c] sm:$0xf]
        %v1512 = vld [vmem:[%s6] sm:$0x1]
        %v1514 = vperm.slane %v1512, 0
        %v1532 = vunpack.c.l.b16 %v1496
        %v1533 = vunpack.c.l.b16 %v1497
        %v1534 = vunpack.c.l.b16 %v1498
        %v1535 = vunpack.c.l.b16 %v1499
        %v1536 = vunpack.c.l.b16 %v1500
        %v1537 = vunpack.c.l.b16 %v1501
        %v1538 = vunpack.c.l.b16 %v1502
        %v1539 = vunpack.c.l.b16 %v1503
        %v1540 = vunpack.c.l.b16 %v1504
        %v1541 = vunpack.c.l.b16 %v1505
        %v1542 = vunpack.c.l.b16 %v1506
        %v1543 = vunpack.c.l.b16 %v1507
        %v1544 = vunpack.c.l.b16 %v1508
        %v1545 = vunpack.c.l.b16 %v1509
        %v1546 = vunpack.c.l.b16 %v1510
        %v1547 = vunpack.c.l.b16 %v1511
        %v1548 = vpack.c.b16 %v1533, %v1532
        %v1549 = vpack.c.b16 %v1535, %v1534
        %v1550 = vpack.c.b16 %v1537, %v1536
        %v1551 = vpack.c.b16 %v1539, %v1538
        %v1552 = vpack.c.b16 %v1541, %v1540
        %v1553 = vpack.c.b16 %v1543, %v1542
        %v1554 = vpack.c.b16 %v1545, %v1544
        %v1555 = vpack.c.b16 %v1547, %v1546
        %1564 = vmatpush.bf16.msra.mxu0 %v1555
        %1565 = vmatpush.bf16.msra.mxu0 %v1554
        %1566 = vmatpush.bf16.msra.mxu0 %v1553
        %1567 = vmatpush.bf16.msra.mxu0 %v1552
        %1568 = vmatpush.bf16.msra.mxu0 %v1551
        %1569 = vmatpush.bf16.msra.mxu0 %v1550
        %1570 = vmatpush.bf16.msra.mxu0 %v1549
        %1571 = vmatpush.bf16.msra.mxu0 %v1548
        %1572 = vmatmul.bf16.gmra.mxu0 %v1492
        %v1573 = vpop.f32.mrf.mxu0
        %v1574 = vadd.f32 %v1514, %v1573
        %v1575 = vpop.f32.mrf.mxu0
        %v1576 = vadd.f32 %v1514, %v1575
        %1577 = vmatmul.bf16.gmra.mxu0 %v1493
        %v1578 = vpop.f32.mrf.mxu0
        %v1579 = vadd.f32 %v1514, %v1578
        %v1580 = vpop.f32.mrf.mxu0
        %v1581 = vadd.f32 %v1514, %v1580
        %1582 = vmatmul.bf16.gmra.mxu0 %v1494
        %v1583 = vpop.f32.mrf.mxu0
        %v1584 = vadd.f32 %v1514, %v1583
        %v1585 = vpop.f32.mrf.mxu0
        %v1586 = vadd.f32 %v1514, %v1585
        %1587 = vmatmul.bf16.gmra.mxu0 %v1495
        %v1588 = vpop.f32.mrf.mxu0
        %v1589 = vadd.f32 %v1514, %v1588
        %v1590 = vpop.f32.mrf.mxu0
        %v1591 = vadd.f32 %v1514, %v1590
        %1592 = vdwg.mxu0
        %v1593 = vunpack.c.l.bf16 %v296
        %v1594 = vunpack.c.l.bf16 %v297
        %v1595 = vunpack.c.l.bf16 %v298
        %v1596 = vunpack.c.l.bf16 %v299
        %v1597 = vunpack.c.l.bf16 %v300
        %v1598 = vunpack.c.l.bf16 %v301
        %v1599 = vunpack.c.l.bf16 %v302
        %v1600 = vunpack.c.l.bf16 %v303
        %v1601 = vadd.f32 %v1574, %v1593
        %v1602 = vadd.f32 %v1576, %v1594
        %v1603 = vadd.f32 %v1579, %v1595
        %v1604 = vadd.f32 %v1581, %v1596
        %v1605 = vadd.f32 %v1584, %v1597
        %v1606 = vadd.f32 %v1586, %v1598
        %v1607 = vadd.f32 %v1589, %v1599
        %v1608 = vadd.f32 %v1591, %v1600
        %v1609 = vmax.f32 %v1601, 0.0
        %v1610 = vmax.f32 %v1602, 0.0
        %v1611 = vmax.f32 %v1603, 0.0
        %v1612 = vmax.f32 %v1604, 0.0
        %v1613 = vmax.f32 %v1605, 0.0
        %v1614 = vmax.f32 %v1606, 0.0
        %v1615 = vmax.f32 %v1607, 0.0
        %v1616 = vmax.f32 %v1608, 0.0
        %v1617 = vpack.c.bf16 %v1609, %v1609
        %v1618 = vpack.c.bf16 %v1610, %v1610
        %v1619 = vpack.c.bf16 %v1611, %v1611
        %v1620 = vpack.c.bf16 %v1612, %v1612
        %v1621 = vpack.c.bf16 %v1613, %v1613
        %v1622 = vpack.c.bf16 %v1614, %v1614
        %v1623 = vpack.c.bf16 %v1615, %v1615
        %v1624 = vpack.c.bf16 %v1616, %v1616
        %1625 = vst [vmem:[%s295] sm:$0xf] %v1617
        %1626 = vst [vmem:[%s295 + $0x4] sm:$0xf] %v1618
        %1627 = vst [vmem:[%s295 + $0x8] sm:$0xf] %v1619
        %1628 = vst [vmem:[%s295 + $0xc] sm:$0xf] %v1620
        %1629 = vst [vmem:[%s295 + $0x10] sm:$0xf] %v1621
        %1630 = vst [vmem:[%s295 + $0x14] sm:$0xf] %v1622
        %1631 = vst [vmem:[%s295 + $0x18] sm:$0xf] %v1623
        %1632 = vst [vmem:[%s295 + $0x1c] sm:$0xf] %v1624
        %p1633 = scmp.lt.s32.totalorder %s19, 1
        %s1634 = scalar_select %p1633, %s19, 1
        %s1635 = smul.addr %s1634, 8
        %s1636 = smul.addr %s1635, 4
        %s1637 = scalar_lea.vmem %s7, %s1636
        // Predicated region
        $region53: #{bottleneck_forward.1} parent=47 // pred_check
          %p1638 = pneg %p189
        $region54: #{bottleneck_forward.1} parent=47 // pred_check_branch
          %1640 = sbr.rel (%p1638) target = $region56
        $region55: #{bottleneck_forward.1} parent=47 // pred_region
          _
        $region56: #{bottleneck_forward.1} parent=47 // pred_fallthru
          _
      $region48: #{bottleneck_forward.1} parent=5 // pred_fallthru
        _
      %p1641 = scmp.le.s32.totalorder 2, %s14
      // Predicated region
      $region57: #{bottleneck_forward.1} parent=5 // pred_check
        %p1642 = pneg %p1641
      $region58: #{bottleneck_forward.1} parent=5 // pred_check_branch
        %1644 = sbr.rel (%p1642) target = $region60
      $region59: #{bottleneck_forward.1} parent=5 // pred_region
        %s1645 = ssub.s32 %s14, 2
        // Predicated region
        $region61: #{bottleneck_forward.1} parent=59 // pred_check
          %p1646 = pneg %p195
        $region62: #{bottleneck_forward.1} parent=59 // pred_check_branch
          %1648 = sbr.rel (%p1646) target = $region64
        $region63: #{bottleneck_forward.1} parent=59 // pred_region
          %p1649 = scmp.lt.s32.totalorder %s20, 1
          %s1650 = scalar_select %p1649, %s20, 1
          %s1651 = smul.addr %s1650, 8
          %s1652 = smul.addr %s1651, 4
          %s1653 = scalar_lea.vmem %s7, %s1652
        $region64: #{bottleneck_forward.1} parent=59 // pred_fallthru
          _
      $region60: #{bottleneck_forward.1} parent=5 // pred_fallthru
        _
    $region6: #{bottleneck_forward.1} parent=1 // loop_footer
      %s18 = sadd.s32 1, %s14
    $region7: #{bottleneck_forward.1} parent=1 // loop_footer_branch
      %13 = sbr.rel target = $region3
    $region8: #{bottleneck_forward.1} parent=1 // loop_exit
      _
    %1654 = vsyncpa [#allocation4], 1
    %s1655 = scalar_lea.sflag [#allocation4], 1
    %1656 = vsyncpa %s1655, 1

</llo_original>
